<compile_context>
chip_gen: v5e
topology: v5e:2x2
jax: 0.10.0
libtpu: 0.0.40
codegen_flags: <defaults>
</compile_context>

<pallas_src>
import jax
import jax.numpy as jnp
from jax.experimental import pallas as pl
from jax.experimental.pallas import tpu as pltpu

DIMS_ST = 4          # stand-in for const.dims_st
DIMS_MHD_STATE = 8   # stand-in for const.dims_mhd_state
LEAKY_SLOPE = 0.01   # torch.nn.LeakyReLU default negative_slope


def _activation(name):
    if name == 'leakyReLu':
        return lambda x: jnp.where(x >= 0, x, LEAKY_SLOPE * x)
    return jnp.tanh  # module default


def _pick_tile_b(B, requested):
    """Lane-dense batch tile. Default: aim for >= 2 grid steps (v7x megacore)
    with as large a tile as possible (capped at 2048)."""
    if requested is not None:
        return max(128, (int(requested) // 128) * 128)
    tile = pl.cdiv(pl.cdiv(B, 2), 128) * 128
    return int(max(128, min(tile, 2048)))


def _make_kernel(n_e, e0_out, e_dim, z_in_dims, act_name, compute_dtype):
    """Kernel body for a fixed architecture.

    n_e        : number of embedding layers
    e0_out     : output width of E0 (for splitting the fused E0/Z0 result)
    e_dim      : embedding width fed to every concat (embedding_layers[-1])
    z_in_dims  : z-input width of each post-concat layer (middle... , final)
    """
    act = _activation(act_name)
    n_mid = len(z_in_dims) - 1

    def kernel(*refs):
        # refs = (st_ref, w/b refs..., out_ref, concat_scratch)
        st_ref = refs[0]
        out_ref = refs[-2]
        cat_ref = refs[-1]
        wb = refs[1:-2]

        st = st_ref[...].astype(compute_dtype)          # (dims_st, tile_b)

        # ---- fused E0 / Z0: single matmul on the stacked weight ----
        i = 0
        ez = jnp.dot(wb[i][...], st,
                     preferred_element_type=jnp.float32) + wb[i + 1][...]
        i += 2
        e = ez[:e0_out]                                  # (e0_out, tile_b) f32
        z = ez[e0_out:]                                  # (z0_out, tile_b) f32

        # ---- embedding branch: e = act(El(e)) for l >= 1 ----
        for _ in range(1, n_e):
            e = act(jnp.dot(wb[i][...], e.astype(compute_dtype),
                            preferred_element_type=jnp.float32) + wb[i + 1][...])
            i += 2

        # e is loop-invariant across the z layers: park it once in the concat
        # scratch rows [0:e_dim]; only the z rows get rewritten per layer.
        cat_ref[0:e_dim, :] = e.astype(compute_dtype)

        # ---- middle layers: z = act(beta*(W @ concat(e,z) + b)), beta folded ----
        for li in range(n_mid):
            zk = z_in_dims[li]
            cat_ref[e_dim:e_dim + zk, :] = z.astype(compute_dtype)
            y = jnp.dot(wb[i][...], cat_ref[0:e_dim + zk, :],
                        preferred_element_type=jnp.float32) + wb[i + 1][...]
            i += 2
            z = act(y)                                   # f32 VPU/EUP math

        # ---- final layer: no activation, no beta ----
        zk = z_in_dims[n_mid]
        cat_ref[e_dim:e_dim + zk, :] = z.astype(compute_dtype)
        out = jnp.dot(wb[i][...], cat_ref[0:e_dim + zk, :],
                      preferred_element_type=jnp.float32) + wb[i + 1][...]
        out_ref[...] = out.astype(out_ref.dtype)

    return kernel


def stb_mlp_forward(st, e_params, z_params, beta, *, act_func='tanh',
                    tile_b=None, compute_dtype=jnp.bfloat16):
    """Pallas STB_MLP forward.

    st:        (B, dims_st) float32
    e_params:  list of (W, b) in PyTorch layout, W: (out, in), b: (out,)
    z_params:  list of (W, b); z_params[i>=1] have in = e_dim + prev_out
               (last entry is the output layer onto dims_mhd_state)
    beta:      (1,) float32
    Returns (B, dims_mhd_state) float32.
    """
    B, dims_st = st.shape
    n_e = len(e_params)
    n_z = len(z_params)
    assert n_e >= 1 and n_z >= 2

    e0_out = e_params[0][0].shape[0]
    e_dim = e_params[-1][0].shape[0]
    out_dim = z_params[-1][0].shape[0]
    z_in_dims = [w.shape[1] - e_dim for (w, _) in z_params[1:]]
    cat_rows = e_dim + max(z_in_dims)

    tile_b = _pick_tile_b(B, tile_b)
    grid = (pl.cdiv(B, tile_b),)

    beta_s = jnp.asarray(beta, jnp.float32).reshape(())

    # Feature-major (batch on the 128-lane axis) -> lane-dense input & output.
    # TODO(synk): the host-side st.T / out.T transposes remain; pass/return
    # feature-major data directly if the caller tolerates it.
    st_t = st.T.astype(jnp.float32)                      # (dims_st, B), no pad

    args, in_specs = [], []

    def add(arr, spec):
        args.append(arr)
        in_specs.append(spec)

    def const2d(arr):
        # Full-array block, constant index map -> DMA'd once, stays resident.
        return pl.BlockSpec(arr.shape, lambda b: (0, 0))

    add(st_t, pl.BlockSpec((dims_st, tile_b), lambda b: (0, b)))

    def add_wb(w, bvec, scale=None):
        w = jnp.asarray(w, jnp.float32)
        bcol = jnp.asarray(bvec, jnp.float32).reshape(-1, 1)
        if scale is not None:                            # fold beta (f32, host side)
            w = w * scale
            bcol = bcol * scale
        w = w.astype(compute_dtype)
        add(w, const2d(w))
        add(bcol, const2d(bcol))

    # Fused first layers: stack [W_E0; W_Z0] -> one MXU push for both branches.
    w0 = jnp.concatenate([jnp.asarray(e_params[0][0], jnp.float32),
                          jnp.asarray(z_params[0][0], jnp.float32)], axis=0)
    b0 = jnp.concatenate([jnp.asarray(e_params[0][1], jnp.float32),
                          jnp.asarray(z_params[0][1], jnp.float32)], axis=0)
    add_wb(w0, b0)

    for w, bvec in e_params[1:]:
        add_wb(w, bvec)
    for w, bvec in z_params[1:-1]:
        add_wb(w, bvec, scale=beta_s)                    # beta folded in
    add_wb(*z_params[-1])

    kernel = _make_kernel(n_e, e0_out, e_dim, z_in_dims, act_func, compute_dtype)

    out_t = pl.pallas_call(
        kernel,
        out_shape=jax.ShapeDtypeStruct((out_dim, B), jnp.float32),
        grid=grid,
        in_specs=in_specs,
        out_specs=pl.BlockSpec((out_dim, tile_b), lambda b: (0, b)),
        scratch_shapes=[pltpu.VMEM((cat_rows, tile_b), compute_dtype)],
        compiler_params=pltpu.CompilerParams(
            dimension_semantics=("parallel",)),          # megacore sharding on v7x
    )(*args)

    return out_t.T


def reference_forward(st, e_params, z_params, beta, act_func='tanh'):
    """Pure-JAX reference matching the PyTorch STB_MLP.forward."""
    act = _activation(act_func)
    w, b = e_params[0]
    e = st @ w.T + b
    for w, b in e_params[1:]:
        e = act(e @ w.T + b)
    w, b = z_params[0]
    z = st @ w.T + b
    for w, b in z_params[1:-1]:
        z = act(beta[0] * (jnp.concatenate([e, z], axis=1) @ w.T + b))
    w, b = z_params[-1]
    return jnp.concatenate([e, z], axis=1) @ w.T + b


def init_params(key, embedding_layers, layers,
                dims_st=DIMS_ST, dims_mhd_state=DIMS_MHD_STATE):
    """Deterministic synthetic parameters in PyTorch (out, in) layout."""
    n = len(embedding_layers) + len(layers) + 1
    keys = jax.random.split(key, 2 * n + 1)
    ki = [0]

    def draw(out_d, in_d):
        w = jax.random.normal(keys[ki[0]], (out_d, in_d), jnp.float32) * 0.1
        b = jax.random.normal(keys[ki[0] + 1], (out_d,), jnp.float32) * 0.1
        ki[0] += 2
        return w, b

    e_params, z_params = [], []
    in_d = dims_st
    for out_d in embedding_layers:
        e_params.append(draw(out_d, in_d))
        in_d = out_d
    e_dim = embedding_layers[-1]
    z_params.append(draw(layers[0], dims_st))
    for idx in range(1, len(layers)):
        z_params.append(draw(layers[idx], e_dim + layers[idx - 1]))
    z_params.append(draw(dims_mhd_state, e_dim + layers[-1]))
    beta = jax.random.normal(keys[-1], (1,), jnp.float32)
    return e_params, z_params, beta


if __name__ == "__main__":
    key = jax.random.PRNGKey(0)
    k_params, k_st = jax.random.split(key)

    embedding_layers = [32, 32]
    layers = [32, 32, 32]
    batch = 1024                 # -> auto tile_b=512, 2 grid steps (both v7x TCs)

    e_params, z_params, beta = init_params(k_params, embedding_layers, layers)
    st = jax.random.normal(k_st, (batch, DIMS_ST), jnp.float32)

    ref_tanh = reference_forward(st, e_params, z_params, beta, act_func='tanh')
    ref_leaky = reference_forward(st, e_params, z_params, beta, act_func='leakyReLu')

    # Default path: bf16 operands, f32 accumulation / bias / activation.
    out_bf16 = stb_mlp_forward(st, e_params, z_params, beta, act_func='tanh')
    out_bf16 = jax.block_until_ready(out_bf16)
    assert out_bf16.shape == (batch, DIMS_MHD_STATE)
    assert jnp.allclose(out_bf16, ref_tanh, atol=5e-2, rtol=5e-2), "bf16/tanh mismatch"

    # Full f32 operand path (tight tolerance).
    out_f32 = stb_mlp_forward(st, e_params, z_params, beta, act_func='tanh',
                              compute_dtype=jnp.float32)
    out_f32 = jax.block_until_ready(out_f32)
    assert jnp.allclose(out_f32, ref_tanh, atol=1e-4, rtol=1e-4), "f32/tanh mismatch"

    # leakyReLu option of the module.
    out_l = stb_mlp_forward(st, e_params, z_params, beta, act_func='leakyReLu',
                            compute_dtype=jnp.float32)
    out_l = jax.block_until_ready(out_l)
    assert jnp.allclose(out_l, ref_leaky, atol=1e-4, rtol=1e-4), "f32/leaky mismatch"

    # Ragged batch: no wrapper-side padding; Pallas masks the partial last block.
    b_r = 1000
    st_r = jax.random.normal(k_st, (b_r, DIMS_ST), jnp.float32)
    ref_r = reference_forward(st_r, e_params, z_params, beta, act_func='tanh')
    out_r = stb_mlp_forward(st_r, e_params, z_params, beta, act_func='tanh',
                            compute_dtype=jnp.float32)
    out_r = jax.block_until_ready(out_r)
    assert out_r.shape == (b_r, DIMS_MHD_STATE)
    assert jnp.allclose(out_r, ref_r, atol=1e-4, rtol=1e-4), "ragged mismatch"

    print("KERNEL_OK")
</pallas_src>

<mosaic_0001>
module attributes {stable_mosaic.version = 11 : i64} {
  func.func @kernel(%arg0: i32, %arg1: memref<4x512xf32, #tpu.memory_space<vmem>>, %arg2: memref<64x4xbf16, #tpu.memory_space<vmem>>, %arg3: memref<64x1xf32, #tpu.memory_space<vmem>>, %arg4: memref<32x32xbf16, #tpu.memory_space<vmem>>, %arg5: memref<32x1xf32, #tpu.memory_space<vmem>>, %arg6: memref<32x64xbf16, #tpu.memory_space<vmem>>, %arg7: memref<32x1xf32, #tpu.memory_space<vmem>>, %arg8: memref<32x64xbf16, #tpu.memory_space<vmem>>, %arg9: memref<32x1xf32, #tpu.memory_space<vmem>>, %arg10: memref<8x64xbf16, #tpu.memory_space<vmem>>, %arg11: memref<8x1xf32, #tpu.memory_space<vmem>>, %arg12: memref<8x512xf32, #tpu.memory_space<vmem>>, %arg13: memref<64x512xbf16, #tpu.memory_space<vmem>>) attributes {dimension_semantics = [#tpu.dimension_semantics<parallel>], iteration_bounds = array<i64: 2>, scalar_prefetch = 0 : i64, scratch_operands = 1 : i64, tpu.core_type = #tpu.core_type<tc>, window_params = [{transform_indices = @transform_0, window_bounds = array<i64: 4, 512>}, {pipeline_mode = #tpu.pipeline_mode<synchronous>, transform_indices = @transform_1, window_bounds = array<i64: 64, 4>}, {pipeline_mode = #tpu.pipeline_mode<synchronous>, transform_indices = @transform_2, window_bounds = array<i64: 64, 1>}, {pipeline_mode = #tpu.pipeline_mode<synchronous>, transform_indices = @transform_3, window_bounds = array<i64: 32, 32>}, {pipeline_mode = #tpu.pipeline_mode<synchronous>, transform_indices = @transform_4, window_bounds = array<i64: 32, 1>}, {pipeline_mode = #tpu.pipeline_mode<synchronous>, transform_indices = @transform_5, window_bounds = array<i64: 32, 64>}, {pipeline_mode = #tpu.pipeline_mode<synchronous>, transform_indices = @transform_6, window_bounds = array<i64: 32, 1>}, {pipeline_mode = #tpu.pipeline_mode<synchronous>, transform_indices = @transform_7, window_bounds = array<i64: 32, 64>}, {pipeline_mode = #tpu.pipeline_mode<synchronous>, transform_indices = @transform_8, window_bounds = array<i64: 32, 1>}, {pipeline_mode = #tpu.pipeline_mode<synchronous>, transform_indices = @transform_9, window_bounds = array<i64: 8, 64>}, {pipeline_mode = #tpu.pipeline_mode<synchronous>, transform_indices = @transform_10, window_bounds = array<i64: 8, 1>}, {transform_indices = @transform_11, window_bounds = array<i64: 8, 512>}]} {
    %c0 = arith.constant 0 : index
    %c0_0 = arith.constant 0 : index
    %0 = vector.load %arg1[%c0, %c0_0] : memref<4x512xf32, #tpu.memory_space<vmem>>, vector<4x512xf32>
    %1 = arith.truncf %0 : vector<4x512xf32> to vector<4x512xbf16>
    %c0_1 = arith.constant 0 : index
    %c0_2 = arith.constant 0 : index
    %2 = vector.load %arg2[%c0_1, %c0_2] : memref<64x4xbf16, #tpu.memory_space<vmem>>, vector<64x4xbf16>
    %cst = arith.constant dense<0.000000e+00> : vector<64x512xf32>
    %3 = tpu.matmul %2, %1, %cst {dimension_numbers = #tpu.dot_dimension_numbers<[1], [0], [0], [1], [0, 0, 1, 1], [], []>} : vector<64x4xbf16>, vector<4x512xbf16>, vector<64x512xf32> -> vector<64x512xf32>
    %c0_3 = arith.constant 0 : index
    %c0_4 = arith.constant 0 : index
    %4 = vector.load %arg3[%c0_3, %c0_4] : memref<64x1xf32, #tpu.memory_space<vmem>>, vector<64x1xf32>
    %5 = vector.broadcast %4 : vector<64x1xf32> to vector<64x512xf32>
    %6 = arith.addf %3, %5 : vector<64x512xf32>
    %7 = vector.extract_strided_slice %6 {offsets = [0, 0], sizes = [32, 512], strides = [1, 1]} : vector<64x512xf32> to vector<32x512xf32>
    %8 = vector.extract_strided_slice %6 {offsets = [32, 0], sizes = [32, 512], strides = [1, 1]} : vector<64x512xf32> to vector<32x512xf32>
    %c0_5 = arith.constant 0 : index
    %c0_6 = arith.constant 0 : index
    %9 = vector.load %arg4[%c0_5, %c0_6] : memref<32x32xbf16, #tpu.memory_space<vmem>>, vector<32x32xbf16>
    %10 = arith.truncf %7 : vector<32x512xf32> to vector<32x512xbf16>
    %cst_7 = arith.constant dense<0.000000e+00> : vector<32x512xf32>
    %11 = tpu.matmul %9, %10, %cst_7 {dimension_numbers = #tpu.dot_dimension_numbers<[1], [0], [0], [1], [0, 0, 1, 1], [], []>} : vector<32x32xbf16>, vector<32x512xbf16>, vector<32x512xf32> -> vector<32x512xf32>
    %c0_8 = arith.constant 0 : index
    %c0_9 = arith.constant 0 : index
    %12 = vector.load %arg5[%c0_8, %c0_9] : memref<32x1xf32, #tpu.memory_space<vmem>>, vector<32x1xf32>
    %13 = vector.broadcast %12 : vector<32x1xf32> to vector<32x512xf32>
    %14 = arith.addf %11, %13 : vector<32x512xf32>
    %15 = math.tanh %14 : vector<32x512xf32>
    %16 = arith.truncf %15 : vector<32x512xf32> to vector<32x512xbf16>
    %c0_10 = arith.constant 0 : index
    %c0_11 = arith.constant 0 : index
    %17 = vector.load %arg13[%c0_10, %c0_11] : memref<64x512xbf16, #tpu.memory_space<vmem>>, vector<32x512xbf16>
    tpu.vector_store %arg13[%c0_10, %c0_11], %16 {strides = array<i32>} : memref<64x512xbf16, #tpu.memory_space<vmem>>, vector<32x512xbf16>,
    %18 = arith.truncf %8 : vector<32x512xf32> to vector<32x512xbf16>
    %c32 = arith.constant 32 : index
    %c0_12 = arith.constant 0 : index
    %19 = vector.load %arg13[%c32, %c0_12] : memref<64x512xbf16, #tpu.memory_space<vmem>>, vector<32x512xbf16>
    tpu.vector_store %arg13[%c32, %c0_12], %18 {strides = array<i32>} : memref<64x512xbf16, #tpu.memory_space<vmem>>, vector<32x512xbf16>,
    %c0_13 = arith.constant 0 : index
    %c0_14 = arith.constant 0 : index
    %20 = vector.load %arg6[%c0_13, %c0_14] : memref<32x64xbf16, #tpu.memory_space<vmem>>, vector<32x64xbf16>
    %c0_15 = arith.constant 0 : index
    %c0_16 = arith.constant 0 : index
    %21 = vector.load %arg13[%c0_15, %c0_16] : memref<64x512xbf16, #tpu.memory_space<vmem>>, vector<64x512xbf16>
    %cst_17 = arith.constant dense<0.000000e+00> : vector<32x512xf32>
    %22 = tpu.matmul %20, %21, %cst_17 {dimension_numbers = #tpu.dot_dimension_numbers<[1], [0], [0], [1], [0, 0, 1, 1], [], []>} : vector<32x64xbf16>, vector<64x512xbf16>, vector<32x512xf32> -> vector<32x512xf32>
    %c0_18 = arith.constant 0 : index
    %c0_19 = arith.constant 0 : index
    %23 = vector.load %arg7[%c0_18, %c0_19] : memref<32x1xf32, #tpu.memory_space<vmem>>, vector<32x1xf32>
    %24 = vector.broadcast %23 : vector<32x1xf32> to vector<32x512xf32>
    %25 = arith.addf %22, %24 : vector<32x512xf32>
    %26 = math.tanh %25 : vector<32x512xf32>
    %27 = arith.truncf %26 : vector<32x512xf32> to vector<32x512xbf16>
    %c32_20 = arith.constant 32 : index
    %c0_21 = arith.constant 0 : index
    %28 = vector.load %arg13[%c32_20, %c0_21] : memref<64x512xbf16, #tpu.memory_space<vmem>>, vector<32x512xbf16>
    tpu.vector_store %arg13[%c32_20, %c0_21], %27 {strides = array<i32>} : memref<64x512xbf16, #tpu.memory_space<vmem>>, vector<32x512xbf16>,
    %c0_22 = arith.constant 0 : index
    %c0_23 = arith.constant 0 : index
    %29 = vector.load %arg8[%c0_22, %c0_23] : memref<32x64xbf16, #tpu.memory_space<vmem>>, vector<32x64xbf16>
    %c0_24 = arith.constant 0 : index
    %c0_25 = arith.constant 0 : index
    %30 = vector.load %arg13[%c0_24, %c0_25] : memref<64x512xbf16, #tpu.memory_space<vmem>>, vector<64x512xbf16>
    %cst_26 = arith.constant dense<0.000000e+00> : vector<32x512xf32>
    %31 = tpu.matmul %29, %30, %cst_26 {dimension_numbers = #tpu.dot_dimension_numbers<[1], [0], [0], [1], [0, 0, 1, 1], [], []>} : vector<32x64xbf16>, vector<64x512xbf16>, vector<32x512xf32> -> vector<32x512xf32>
    %c0_27 = arith.constant 0 : index
    %c0_28 = arith.constant 0 : index
    %32 = vector.load %arg9[%c0_27, %c0_28] : memref<32x1xf32, #tpu.memory_space<vmem>>, vector<32x1xf32>
    %33 = vector.broadcast %32 : vector<32x1xf32> to vector<32x512xf32>
    %34 = arith.addf %31, %33 : vector<32x512xf32>
    %35 = math.tanh %34 : vector<32x512xf32>
    %36 = arith.truncf %35 : vector<32x512xf32> to vector<32x512xbf16>
    %c32_29 = arith.constant 32 : index
    %c0_30 = arith.constant 0 : index
    %37 = vector.load %arg13[%c32_29, %c0_30] : memref<64x512xbf16, #tpu.memory_space<vmem>>, vector<32x512xbf16>
    tpu.vector_store %arg13[%c32_29, %c0_30], %36 {strides = array<i32>} : memref<64x512xbf16, #tpu.memory_space<vmem>>, vector<32x512xbf16>,
    %c0_31 = arith.constant 0 : index
    %c0_32 = arith.constant 0 : index
    %38 = vector.load %arg10[%c0_31, %c0_32] : memref<8x64xbf16, #tpu.memory_space<vmem>>, vector<8x64xbf16>
    %c0_33 = arith.constant 0 : index
    %c0_34 = arith.constant 0 : index
    %39 = vector.load %arg13[%c0_33, %c0_34] : memref<64x512xbf16, #tpu.memory_space<vmem>>, vector<64x512xbf16>
    %cst_35 = arith.constant dense<0.000000e+00> : vector<8x512xf32>
    %40 = tpu.matmul %38, %39, %cst_35 {dimension_numbers = #tpu.dot_dimension_numbers<[1], [0], [0], [1], [0, 0, 1, 1], [], []>} : vector<8x64xbf16>, vector<64x512xbf16>, vector<8x512xf32> -> vector<8x512xf32>
    %c0_36 = arith.constant 0 : index
    %c0_37 = arith.constant 0 : index
    %41 = vector.load %arg11[%c0_36, %c0_37] : memref<8x1xf32, #tpu.memory_space<vmem>>, vector<8x1xf32>
    %42 = vector.broadcast %41 : vector<8x1xf32> to vector<8x512xf32>
    %43 = arith.addf %40, %42 : vector<8x512xf32>
    %c0_38 = arith.constant 0 : index
    %c0_39 = arith.constant 0 : index
    %44 = vector.load %arg12[%c0_38, %c0_39] : memref<8x512xf32, #tpu.memory_space<vmem>>, vector<8x512xf32>
    tpu.vector_store %arg12[%c0_38, %c0_39], %43 {strides = array<i32>} : memref<8x512xf32, #tpu.memory_space<vmem>>, vector<8x512xf32>,
    return
  }
  func.func @transform_0(%arg0: i32) -> (i32, i32) {
    %c0_i32 = arith.constant 0 : i32
    %c0_i32_0 = arith.constant 0 : i32
    return %c0_i32, %arg0 : i32, i32
  }
  func.func @transform_1(%arg0: i32) -> (i32, i32) {
    %c0_i32 = arith.constant 0 : i32
    %c0_i32_0 = arith.constant 0 : i32
    %c0_i32_1 = arith.constant 0 : i32
    return %c0_i32, %c0_i32_0 : i32, i32
  }
  func.func @transform_2(%arg0: i32) -> (i32, i32) {
    %c0_i32 = arith.constant 0 : i32
    %c0_i32_0 = arith.constant 0 : i32
    %c0_i32_1 = arith.constant 0 : i32
    return %c0_i32, %c0_i32_0 : i32, i32
  }
  func.func @transform_3(%arg0: i32) -> (i32, i32) {
    %c0_i32 = arith.constant 0 : i32
    %c0_i32_0 = arith.constant 0 : i32
    %c0_i32_1 = arith.constant 0 : i32
    return %c0_i32, %c0_i32_0 : i32, i32
  }
  func.func @transform_4(%arg0: i32) -> (i32, i32) {
    %c0_i32 = arith.constant 0 : i32
    %c0_i32_0 = arith.constant 0 : i32
    %c0_i32_1 = arith.constant 0 : i32
    return %c0_i32, %c0_i32_0 : i32, i32
  }
  func.func @transform_5(%arg0: i32) -> (i32, i32) {
    %c0_i32 = arith.constant 0 : i32
    %c0_i32_0 = arith.constant 0 : i32
    %c0_i32_1 = arith.constant 0 : i32
    return %c0_i32, %c0_i32_0 : i32, i32
  }
  func.func @transform_6(%arg0: i32) -> (i32, i32) {
    %c0_i32 = arith.constant 0 : i32
    %c0_i32_0 = arith.constant 0 : i32
    %c0_i32_1 = arith.constant 0 : i32
    return %c0_i32, %c0_i32_0 : i32, i32
  }
  func.func @transform_7(%arg0: i32) -> (i32, i32) {
    %c0_i32 = arith.constant 0 : i32
    %c0_i32_0 = arith.constant 0 : i32
    %c0_i32_1 = arith.constant 0 : i32
    return %c0_i32, %c0_i32_0 : i32, i32
  }
  func.func @transform_8(%arg0: i32) -> (i32, i32) {
    %c0_i32 = arith.constant 0 : i32
    %c0_i32_0 = arith.constant 0 : i32
    %c0_i32_1 = arith.constant 0 : i32
    return %c0_i32, %c0_i32_0 : i32, i32
  }
  func.func @transform_9(%arg0: i32) -> (i32, i32) {
    %c0_i32 = arith.constant 0 : i32
    %c0_i32_0 = arith.constant 0 : i32
    %c0_i32_1 = arith.constant 0 : i32
    return %c0_i32, %c0_i32_0 : i32, i32
  }
  func.func @transform_10(%arg0: i32) -> (i32, i32) {
    %c0_i32 = arith.constant 0 : i32
    %c0_i32_0 = arith.constant 0 : i32
    %c0_i32_1 = arith.constant 0 : i32
    return %c0_i32, %c0_i32_0 : i32, i32
  }
  func.func @transform_11(%arg0: i32) -> (i32, i32) {
    %c0_i32 = arith.constant 0 : i32
    %c0_i32_0 = arith.constant 0 : i32
    return %c0_i32, %arg0 : i32, i32
  }
}

</mosaic_0001>

<llo_original>
// kernel: tpu_custom_call.1
$region0: #{tpu_custom_call.1}
  #allocation0 [shape = 'u32[]', space=smem, size = 0x4, offset = 0x4, fixed_abs, tag = 'smem constant byte address 0x4 - core index']
  #allocation1 [shape = 'u32[72,128]{1,0:T(1,128)}', space=vmem, size = 0x9000, scoped, tag = 'internal scratch']
  #allocation2 [shape = 'bf16[64,512]{1,0:T(8,128)(2,1)}', space=vmem, size = 0x10000, scoped, tag = 'scratch operand']
  %s0 = inlined_call_operand.vmem [shape: f32[4,1024], index: 0, kind: input, shape index: {}]
  %s1 = inlined_call_operand.vmem [shape: bf16[64,4], index: 1, kind: input, shape index: {}]
  %s2 = inlined_call_operand.vmem [shape: f32[64,1], index: 2, kind: input, shape index: {}]
  %s3 = inlined_call_operand.vmem [shape: bf16[32,32], index: 3, kind: input, shape index: {}]
  %s4 = inlined_call_operand.vmem [shape: f32[32,1], index: 4, kind: input, shape index: {}]
  %s5 = inlined_call_operand.vmem [shape: bf16[32,64], index: 5, kind: input, shape index: {}]
  %s6 = inlined_call_operand.vmem [shape: f32[32,1], index: 6, kind: input, shape index: {}]
  %s7 = inlined_call_operand.vmem [shape: bf16[32,64], index: 7, kind: input, shape index: {}]
  %s8 = inlined_call_operand.vmem [shape: f32[32,1], index: 8, kind: input, shape index: {}]
  %s9 = inlined_call_operand.vmem [shape: bf16[8,64], index: 9, kind: input, shape index: {}]
  %s10 = inlined_call_operand.vmem [shape: f32[8,1], index: 10, kind: input, shape index: {}]
  %s11 = inlined_call_operand.hbm [shape: f32[8,1024], index: 11, kind: output, shape index: {}]
  %s12 = sld [smem:[#allocation0]]
  $region77: #{tpu_custom_call.1} parent=0
    _
  %s14 = ssub.s32 1, %s12
  %s15 = scalar_select 0, %s14, %s12
  $region1: #{tpu_custom_call.1} parent=0
    #allocation3 [shape = 'u8[32768]{0}', space=vmem, size = 0x8000, scoped, tag = 'output window, operand 0']
    #allocation4 [shape = 's32[2]{0}', space=sflag, size = 0x8, scoped, tag = 'scoped memory for tpu_custom_call.1']
    %16 = vsyncpa [#allocation4], 0
    %s17 = scalar_lea.sflag [#allocation4], 1
    %18 = vsyncpa %s17, 0
    loop: start=0, step=1, limit=4
    $region2: #{tpu_custom_call.1} parent=1 // loop_pre_header
      _
    $region3: #{tpu_custom_call.1} parent=1 // loop_header
      %s20 = sphi 0, %s24
      %p21 = scmp.ge.s32.totalorder %s20, 4
      %s30 = sphi 0, %s32
      %s33 = sphi 0, %s30
      %s34 = sphi 0, %s33
      %s50 = sphi 0, %s34
      %s54 = sphi 0, %s54
      %s56 = sphi 0, %s54
      %s57 = sphi 0, %s56
      %s71 = sphi 0, %s57
      %s75 = sphi 0, %s75
      %s77 = sphi 0, %s75
      %s78 = sphi 0, %s77
      %s92 = sphi 0, %s78
      %s96 = sphi 0, %s96
      %s98 = sphi 0, %s96
      %s99 = sphi 0, %s98
      %s113 = sphi 0, %s99
      %s117 = sphi 0, %s117
      %s119 = sphi 0, %s117
      %s120 = sphi 0, %s119
      %s134 = sphi 0, %s120
      %s138 = sphi 0, %s138
      %s140 = sphi 0, %s138
      %s141 = sphi 0, %s140
      %s155 = sphi 0, %s141
      %s159 = sphi 0, %s159
      %s161 = sphi 0, %s159
      %s162 = sphi 0, %s161
      %s176 = sphi 0, %s162
      %s180 = sphi 0, %s180
      %s182 = sphi 0, %s180
      %s183 = sphi 0, %s182
      %s197 = sphi 0, %s183
      %s201 = sphi 0, %s201
      %s203 = sphi 0, %s201
      %s204 = sphi 0, %s203
      %s218 = sphi 0, %s204
      %s222 = sphi 0, %s222
      %s224 = sphi 0, %s222
      %s225 = sphi 0, %s224
      %s239 = sphi 0, %s225
      %s243 = sphi 0, %s243
      %s245 = sphi 0, %s243
      %s246 = sphi 0, %s245
      %s260 = sphi 0, %s246
      %s266 = sphi 0, %s268
      %s269 = sphi 0, %s266
      %s270 = sphi 0, %s269
      %s286 = sphi 0, %s270
    $region4: #{tpu_custom_call.1} parent=1 // loop_header_branch
      %23 = sbr.rel (%p21) target = $region8
    $region5: #{tpu_custom_call.1} parent=1 // loop_body
      %s25 = ssub.s32 %s20, 1
      %s26 = ssub.s32 %s20, 2
      %s27 = sadd.s32 %s20, 1
      %s28 = ssub.s32 %s20, %s27
      %p29 = scmp.eq.s32.totalorder %s28, 0
      %s31 = sadd.s32 %s30, 1
      %s32 = scalar_select %p29, %s30, %s31
      %p35 = pneg %p29
      %p36 = scmp.eq.s32.totalorder %s20, 1
      %p37 = por %p35, %p36
      %p38 = scmp.ne.s32.totalorder %s30, %s33
      %p39 = scmp.eq.s32.totalorder %s20, 0
      %p40 = por %p38, %p39
      %p41 = scmp.ne.s32.totalorder %s30, %s33
      %p42 = scmp.eq.s32.totalorder %s25, 1
      %p43 = por %p41, %p42
      %p44 = scmp.ne.s32.totalorder %s33, %s34
      %p45 = scmp.eq.s32.totalorder %s25, 0
      %p46 = por %p44, %p45
      %p47 = scmp.ne.s32.totalorder %s33, %s34
      %p48 = scmp.eq.s32.totalorder %s26, 1
      %p49 = por %p47, %p48
      %p51 = scmp.ne.s32.totalorder %s34, %s50
      %p52 = scmp.eq.s32.totalorder %s26, 0
      %p53 = por %p51, %p52
      %s55 = sadd.s32 %s54, 1
      %p58 = scmp.eq.s32.totalorder %s20, 1
      %p59 = scmp.ne.s32.totalorder %s54, %s56
      %p60 = scmp.eq.s32.totalorder %s20, 0
      %p61 = por %p59, %p60
      %p62 = scmp.ne.s32.totalorder %s54, %s56
      %p63 = scmp.eq.s32.totalorder %s25, 1
      %p64 = por %p62, %p63
      %p65 = scmp.ne.s32.totalorder %s56, %s57
      %p66 = scmp.eq.s32.totalorder %s25, 0
      %p67 = por %p65, %p66
      %p68 = scmp.ne.s32.totalorder %s56, %s57
      %p69 = scmp.eq.s32.totalorder %s26, 1
      %p70 = por %p68, %p69
      %p72 = scmp.ne.s32.totalorder %s57, %s71
      %p73 = scmp.eq.s32.totalorder %s26, 0
      %p74 = por %p72, %p73
      %s76 = sadd.s32 %s75, 1
      %p79 = scmp.eq.s32.totalorder %s20, 1
      %p80 = scmp.ne.s32.totalorder %s75, %s77
      %p81 = scmp.eq.s32.totalorder %s20, 0
      %p82 = por %p80, %p81
      %p83 = scmp.ne.s32.totalorder %s75, %s77
      %p84 = scmp.eq.s32.totalorder %s25, 1
      %p85 = por %p83, %p84
      %p86 = scmp.ne.s32.totalorder %s77, %s78
      %p87 = scmp.eq.s32.totalorder %s25, 0
      %p88 = por %p86, %p87
      %p89 = scmp.ne.s32.totalorder %s77, %s78
      %p90 = scmp.eq.s32.totalorder %s26, 1
      %p91 = por %p89, %p90
      %p93 = scmp.ne.s32.totalorder %s78, %s92
      %p94 = scmp.eq.s32.totalorder %s26, 0
      %p95 = por %p93, %p94
      %s97 = sadd.s32 %s96, 1
      %p100 = scmp.eq.s32.totalorder %s20, 1
      %p101 = scmp.ne.s32.totalorder %s96, %s98
      %p102 = scmp.eq.s32.totalorder %s20, 0
      %p103 = por %p101, %p102
      %p104 = scmp.ne.s32.totalorder %s96, %s98
      %p105 = scmp.eq.s32.totalorder %s25, 1
      %p106 = por %p104, %p105
      %p107 = scmp.ne.s32.totalorder %s98, %s99
      %p108 = scmp.eq.s32.totalorder %s25, 0
      %p109 = por %p107, %p108
      %p110 = scmp.ne.s32.totalorder %s98, %s99
      %p111 = scmp.eq.s32.totalorder %s26, 1
      %p112 = por %p110, %p111
      %p114 = scmp.ne.s32.totalorder %s99, %s113
      %p115 = scmp.eq.s32.totalorder %s26, 0
      %p116 = por %p114, %p115
      %s118 = sadd.s32 %s117, 1
      %p121 = scmp.eq.s32.totalorder %s20, 1
      %p122 = scmp.ne.s32.totalorder %s117, %s119
      %p123 = scmp.eq.s32.totalorder %s20, 0
      %p124 = por %p122, %p123
      %p125 = scmp.ne.s32.totalorder %s117, %s119
      %p126 = scmp.eq.s32.totalorder %s25, 1
      %p127 = por %p125, %p126
      %p128 = scmp.ne.s32.totalorder %s119, %s120
      %p129 = scmp.eq.s32.totalorder %s25, 0
      %p130 = por %p128, %p129
      %p131 = scmp.ne.s32.totalorder %s119, %s120
      %p132 = scmp.eq.s32.totalorder %s26, 1
      %p133 = por %p131, %p132
      %p135 = scmp.ne.s32.totalorder %s120, %s134
      %p136 = scmp.eq.s32.totalorder %s26, 0
      %p137 = por %p135, %p136
      %s139 = sadd.s32 %s138, 1
      %p142 = scmp.eq.s32.totalorder %s20, 1
      %p143 = scmp.ne.s32.totalorder %s138, %s140
      %p144 = scmp.eq.s32.totalorder %s20, 0
      %p145 = por %p143, %p144
      %p146 = scmp.ne.s32.totalorder %s138, %s140
      %p147 = scmp.eq.s32.totalorder %s25, 1
      %p148 = por %p146, %p147
      %p149 = scmp.ne.s32.totalorder %s140, %s141
      %p150 = scmp.eq.s32.totalorder %s25, 0
      %p151 = por %p149, %p150
      %p152 = scmp.ne.s32.totalorder %s140, %s141
      %p153 = scmp.eq.s32.totalorder %s26, 1
      %p154 = por %p152, %p153
      %p156 = scmp.ne.s32.totalorder %s141, %s155
      %p157 = scmp.eq.s32.totalorder %s26, 0
      %p158 = por %p156, %p157
      %s160 = sadd.s32 %s159, 1
      %p163 = scmp.eq.s32.totalorder %s20, 1
      %p164 = scmp.ne.s32.totalorder %s159, %s161
      %p165 = scmp.eq.s32.totalorder %s20, 0
      %p166 = por %p164, %p165
      %p167 = scmp.ne.s32.totalorder %s159, %s161
      %p168 = scmp.eq.s32.totalorder %s25, 1
      %p169 = por %p167, %p168
      %p170 = scmp.ne.s32.totalorder %s161, %s162
      %p171 = scmp.eq.s32.totalorder %s25, 0
      %p172 = por %p170, %p171
      %p173 = scmp.ne.s32.totalorder %s161, %s162
      %p174 = scmp.eq.s32.totalorder %s26, 1
      %p175 = por %p173, %p174
      %p177 = scmp.ne.s32.totalorder %s162, %s176
      %p178 = scmp.eq.s32.totalorder %s26, 0
      %p179 = por %p177, %p178
      %s181 = sadd.s32 %s180, 1
      %p184 = scmp.eq.s32.totalorder %s20, 1
      %p185 = scmp.ne.s32.totalorder %s180, %s182
      %p186 = scmp.eq.s32.totalorder %s20, 0
      %p187 = por %p185, %p186
      %p188 = scmp.ne.s32.totalorder %s180, %s182
      %p189 = scmp.eq.s32.totalorder %s25, 1
      %p190 = por %p188, %p189
      %p191 = scmp.ne.s32.totalorder %s182, %s183
      %p192 = scmp.eq.s32.totalorder %s25, 0
      %p193 = por %p191, %p192
      %p194 = scmp.ne.s32.totalorder %s182, %s183
      %p195 = scmp.eq.s32.totalorder %s26, 1
      %p196 = por %p194, %p195
      %p198 = scmp.ne.s32.totalorder %s183, %s197
      %p199 = scmp.eq.s32.totalorder %s26, 0
      %p200 = por %p198, %p199
      %s202 = sadd.s32 %s201, 1
      %p205 = scmp.eq.s32.totalorder %s20, 1
      %p206 = scmp.ne.s32.totalorder %s201, %s203
      %p207 = scmp.eq.s32.totalorder %s20, 0
      %p208 = por %p206, %p207
      %p209 = scmp.ne.s32.totalorder %s201, %s203
      %p210 = scmp.eq.s32.totalorder %s25, 1
      %p211 = por %p209, %p210
      %p212 = scmp.ne.s32.totalorder %s203, %s204
      %p213 = scmp.eq.s32.totalorder %s25, 0
      %p214 = por %p212, %p213
      %p215 = scmp.ne.s32.totalorder %s203, %s204
      %p216 = scmp.eq.s32.totalorder %s26, 1
      %p217 = por %p215, %p216
      %p219 = scmp.ne.s32.totalorder %s204, %s218
      %p220 = scmp.eq.s32.totalorder %s26, 0
      %p221 = por %p219, %p220
      %s223 = sadd.s32 %s222, 1
      %p226 = scmp.eq.s32.totalorder %s20, 1
      %p227 = scmp.ne.s32.totalorder %s222, %s224
      %p228 = scmp.eq.s32.totalorder %s20, 0
      %p229 = por %p227, %p228
      %p230 = scmp.ne.s32.totalorder %s222, %s224
      %p231 = scmp.eq.s32.totalorder %s25, 1
      %p232 = por %p230, %p231
      %p233 = scmp.ne.s32.totalorder %s224, %s225
      %p234 = scmp.eq.s32.totalorder %s25, 0
      %p235 = por %p233, %p234
      %p236 = scmp.ne.s32.totalorder %s224, %s225
      %p237 = scmp.eq.s32.totalorder %s26, 1
      %p238 = por %p236, %p237
      %p240 = scmp.ne.s32.totalorder %s225, %s239
      %p241 = scmp.eq.s32.totalorder %s26, 0
      %p242 = por %p240, %p241
      %s244 = sadd.s32 %s243, 1
      %p247 = scmp.eq.s32.totalorder %s20, 1
      %p248 = scmp.ne.s32.totalorder %s243, %s245
      %p249 = scmp.eq.s32.totalorder %s20, 0
      %p250 = por %p248, %p249
      %p251 = scmp.ne.s32.totalorder %s243, %s245
      %p252 = scmp.eq.s32.totalorder %s25, 1
      %p253 = por %p251, %p252
      %p254 = scmp.ne.s32.totalorder %s245, %s246
      %p255 = scmp.eq.s32.totalorder %s25, 0
      %p256 = por %p254, %p255
      %p257 = scmp.ne.s32.totalorder %s245, %s246
      %p258 = scmp.eq.s32.totalorder %s26, 1
      %p259 = por %p257, %p258
      %p261 = scmp.ne.s32.totalorder %s246, %s260
      %p262 = scmp.eq.s32.totalorder %s26, 0
      %p263 = por %p261, %p262
      %s264 = ssub.s32 %s20, %s27
      %p265 = scmp.eq.s32.totalorder %s264, 0
      %s267 = sadd.s32 %s266, 1
      %s268 = scalar_select %p265, %s266, %s267
      %p271 = pneg %p265
      %p272 = scmp.eq.s32.totalorder %s20, 1
      %p273 = por %p271, %p272
      %p274 = scmp.ne.s32.totalorder %s266, %s269
      %p275 = scmp.eq.s32.totalorder %s20, 0
      %p276 = por %p274, %p275
      %p277 = scmp.ne.s32.totalorder %s266, %s269
      %p278 = scmp.eq.s32.totalorder %s25, 1
      %p279 = por %p277, %p278
      %p280 = scmp.ne.s32.totalorder %s269, %s270
      %p281 = scmp.eq.s32.totalorder %s25, 0
      %p282 = por %p280, %p281
      %p283 = scmp.ne.s32.totalorder %s269, %s270
      %p284 = scmp.eq.s32.totalorder %s26, 1
      %p285 = por %p283, %p284
      %p287 = scmp.ne.s32.totalorder %s270, %s286
      %p288 = scmp.eq.s32.totalorder %s26, 0
      %p289 = por %p287, %p288
      %p290 = scmp.le.s32.totalorder 1, %s20
      %p291 = scmp.lt.s32.totalorder %s20, 3
      %p292 = pnand %p290, %p291
      %p293 = pneg %p292
      // Predicated region
      $region9: #{tpu_custom_call.1} parent=5 // pred_check
        _
      $region10: #{tpu_custom_call.1} parent=5 // pred_check_branch
        %295 = sbr.rel (%p292) target = $region12
      $region11: #{tpu_custom_call.1} parent=5 // pred_region
        %s296 = ssub.s32 %s20, 1
        // Predicated region
        $region13: #{tpu_custom_call.1} parent=11 // pred_check
          %p297 = pneg %p67
        $region14: #{tpu_custom_call.1} parent=11 // pred_check_branch
          %299 = sbr.rel (%p297) target = $region16
        $region15: #{tpu_custom_call.1} parent=11 // pred_region
          _
        $region16: #{tpu_custom_call.1} parent=11 // pred_fallthru
          _
        // Predicated region
        $region17: #{tpu_custom_call.1} parent=11 // pred_check
          %p300 = pneg %p88
        $region18: #{tpu_custom_call.1} parent=11 // pred_check_branch
          %302 = sbr.rel (%p300) target = $region20
        $region19: #{tpu_custom_call.1} parent=11 // pred_region
          _
        $region20: #{tpu_custom_call.1} parent=11 // pred_fallthru
          _
        // Predicated region
        $region21: #{tpu_custom_call.1} parent=11 // pred_check
          %p303 = pneg %p109
        $region22: #{tpu_custom_call.1} parent=11 // pred_check_branch
          %305 = sbr.rel (%p303) target = $region24
        $region23: #{tpu_custom_call.1} parent=11 // pred_region
          _
        $region24: #{tpu_custom_call.1} parent=11 // pred_fallthru
          _
        // Predicated region
        $region25: #{tpu_custom_call.1} parent=11 // pred_check
          %p306 = pneg %p130
        $region26: #{tpu_custom_call.1} parent=11 // pred_check_branch
          %308 = sbr.rel (%p306) target = $region28
        $region27: #{tpu_custom_call.1} parent=11 // pred_region
          _
        $region28: #{tpu_custom_call.1} parent=11 // pred_fallthru
          _
        // Predicated region
        $region29: #{tpu_custom_call.1} parent=11 // pred_check
          %p309 = pneg %p151
        $region30: #{tpu_custom_call.1} parent=11 // pred_check_branch
          %311 = sbr.rel (%p309) target = $region32
        $region31: #{tpu_custom_call.1} parent=11 // pred_region
          _
        $region32: #{tpu_custom_call.1} parent=11 // pred_fallthru
          _
        // Predicated region
        $region33: #{tpu_custom_call.1} parent=11 // pred_check
          %p312 = pneg %p172
        $region34: #{tpu_custom_call.1} parent=11 // pred_check_branch
          %314 = sbr.rel (%p312) target = $region36
        $region35: #{tpu_custom_call.1} parent=11 // pred_region
          _
        $region36: #{tpu_custom_call.1} parent=11 // pred_fallthru
          _
        // Predicated region
        $region37: #{tpu_custom_call.1} parent=11 // pred_check
          %p315 = pneg %p193
        $region38: #{tpu_custom_call.1} parent=11 // pred_check_branch
          %317 = sbr.rel (%p315) target = $region40
        $region39: #{tpu_custom_call.1} parent=11 // pred_region
          _
        $region40: #{tpu_custom_call.1} parent=11 // pred_fallthru
          _
        // Predicated region
        $region41: #{tpu_custom_call.1} parent=11 // pred_check
          %p318 = pneg %p214
        $region42: #{tpu_custom_call.1} parent=11 // pred_check_branch
          %320 = sbr.rel (%p318) target = $region44
        $region43: #{tpu_custom_call.1} parent=11 // pred_region
          _
        $region44: #{tpu_custom_call.1} parent=11 // pred_fallthru
          _
        // Predicated region
        $region45: #{tpu_custom_call.1} parent=11 // pred_check
          %p321 = pneg %p235
        $region46: #{tpu_custom_call.1} parent=11 // pred_check_branch
          %323 = sbr.rel (%p321) target = $region48
        $region47: #{tpu_custom_call.1} parent=11 // pred_region
          _
        $region48: #{tpu_custom_call.1} parent=11 // pred_fallthru
          _
        // Predicated region
        $region49: #{tpu_custom_call.1} parent=11 // pred_check
          %p324 = pneg %p256
        $region50: #{tpu_custom_call.1} parent=11 // pred_check_branch
          %326 = sbr.rel (%p324) target = $region52
        $region51: #{tpu_custom_call.1} parent=11 // pred_region
          _
        $region52: #{tpu_custom_call.1} parent=11 // pred_fallthru
          _
      $region12: #{tpu_custom_call.1} parent=5 // pred_fallthru
        _
      %p327 = scmp.lt.s32.totalorder %s20, 2
      // Predicated region
      $region53: #{tpu_custom_call.1} parent=5 // pred_check
        %p328 = pneg %p327
      $region54: #{tpu_custom_call.1} parent=5 // pred_check_branch
        %330 = sbr.rel (%p328) target = $region56
      $region55: #{tpu_custom_call.1} parent=5 // pred_region
        // Predicated region
        $region57: #{tpu_custom_call.1} parent=55 // pred_check
          %p331 = pneg %p40
        $region58: #{tpu_custom_call.1} parent=55 // pred_check_branch
          %333 = sbr.rel (%p331) target = $region60
        $region59: #{tpu_custom_call.1} parent=55 // pred_region
          %s334 = smul.u32 4, %s20
          %p335 = scmp.lt.s32.totalorder %s334, 7
          %s336 = scalar_select %p335, %s334, 7
          %s337 = smul.addr %s336, 4
          %s338 = scalar_lea.vmem %s0, %s337
          %s339 = smul.u32 4, %s20
        $region60: #{tpu_custom_call.1} parent=55 // pred_fallthru
          _
      $region56: #{tpu_custom_call.1} parent=5 // pred_fallthru
        _
      %p340 = scmp.le.s32.totalorder 1, %s20
      %p341 = scmp.lt.s32.totalorder %s20, 3
      %p342 = pnand %p340, %p341
      %p343 = pneg %p342
      // Predicated region
      $region61: #{tpu_custom_call.1} parent=5 // pred_check
        _
      $region62: #{tpu_custom_call.1} parent=5 // pred_check_branch
        %345 = sbr.rel (%p342) target = $region64
      $region63: #{tpu_custom_call.1} parent=5 // pred_region
        %s346 = ssub.s32 %s20, 1
        %s347 = smul.u32 4, %s25
        %p348 = scmp.lt.s32.totalorder %s347, 7
        %s349 = scalar_select %p348, %s347, 7
        %s350 = smul.addr %s349, 4
        %s351 = scalar_lea.vmem %s0, %s350
        %p352 = pneg %p46
        %p353 = pneg %p43
        %p354 = pneg %p67
        %p355 = pneg %p64
        %p356 = pneg %p88
        %p357 = pneg %p85
        %p358 = pneg %p109
        %p359 = pneg %p106
        %p360 = pneg %p130
        %p361 = pneg %p127
        %p362 = pneg %p151
        %p363 = pneg %p148
        %p364 = pneg %p172
        %p365 = pneg %p169
        %p366 = pneg %p193
        %p367 = pneg %p190
        %p368 = pneg %p214
        %p369 = pneg %p211
        %p370 = pneg %p235
        %p371 = pneg %p232
        %p372 = pneg %p256
        %p373 = pneg %p253
        %p374 = pneg %p282
        %p375 = pneg %p279
        %s376 = sand.u32 %s269, 1
        %s377 = scalar_lea.sflag [#allocation4], %s376
        %s378 = sand.u32 %s269, 1
        %s379 = smul.addr %s378, 32
        %s380 = scalar_lea.vmem [#allocation3], %s379
        %s381 = smul.u32 4, %s25
        %p382 = scmp.lt.s32.totalorder %s381, 7
        %s383 = scalar_select %p382, %s381, 7
        %s384 = smul.addr %s383, 4
        %s385 = scalar_lea.vmem %s0, %s384
        %s386 = smul.u32 4, %s25
        %s387 = smul.u32 4, %s25
        %v389 = vld [vmem:[%s385] sm:$0xff]
        %v390 = vld [vmem:[%s385 + $0x8] sm:$0xff]
        %393 = vst [vmem:[#allocation1] ss:$2 sm:$0xff] %v389
        %s394 = scalar_lea.vmem [#allocation1], 16
        %395 = vst [vmem:[%s394] ss:$2 sm:$0xff] %v390
        %v396 = vld.sshfl [vmem:[#allocation1] sm:$0xff pattern:$0x75316420]
        %v397 = vld.sshfl [vmem:[#allocation1 + $0x8] sm:$0xff pattern:$0x75316420]
        %v398 = vld.sshfl [vmem:[#allocation1 + $0x10] sm:$0xff pattern:$0x75316420]
        %v399 = vld.sshfl [vmem:[#allocation1 + $0x18] sm:$0xff pattern:$0x75316420]
        %v404 = vpack.c.bf16 %v396, %v396
        %v405 = vpack.c.bf16 %v397, %v397
        %v406 = vpack.c.bf16 %v398, %v398
        %v407 = vpack.c.bf16 %v399, %v399
        %v408 = vld [vmem:[%s1] sm:$0xf]
        %v409 = vld [vmem:[%s1 + $0x4] sm:$0xf]
        %v410 = vld [vmem:[%s1 + $0x8] sm:$0xf]
        %v411 = vld [vmem:[%s1 + $0xc] sm:$0xf]
        %v412 = vld [vmem:[%s1 + $0x10] sm:$0xf]
        %v413 = vld [vmem:[%s1 + $0x14] sm:$0xf]
        %v414 = vld [vmem:[%s1 + $0x18] sm:$0xf]
        %v415 = vld [vmem:[%s1 + $0x1c] sm:$0xf]
        %v416 = vld [vmem:[%s2] sm:$0xff]
        %v417 = vld [vmem:[%s2 + $0x8] sm:$0xff]
        %v418 = vld [vmem:[%s2 + $0x10] sm:$0xff]
        %v419 = vld [vmem:[%s2 + $0x18] sm:$0xff]
        %v420 = vld [vmem:[%s2 + $0x20] sm:$0xff]
        %v421 = vld [vmem:[%s2 + $0x28] sm:$0xff]
        %v422 = vld [vmem:[%s2 + $0x30] sm:$0xff]
        %v423 = vld [vmem:[%s2 + $0x38] sm:$0xff]
        %425 = vset.pattern.permute.xlu0 0
        %426 = vperm.xlu0 %425, %v416
        %v427 = vpop.permute.xlu0 %426
        %430 = vset.pattern.permute.xlu0 0
        %431 = vperm.xlu0 %430, %v417
        %v432 = vpop.permute.xlu0 %431
        %435 = vset.pattern.permute.xlu0 0
        %436 = vperm.xlu0 %435, %v418
        %v437 = vpop.permute.xlu0 %436
        %440 = vset.pattern.permute.xlu0 0
        %441 = vperm.xlu0 %440, %v419
        %v442 = vpop.permute.xlu0 %441
        %445 = vset.pattern.permute.xlu0 0
        %446 = vperm.xlu0 %445, %v420
        %v447 = vpop.permute.xlu0 %446
        %450 = vset.pattern.permute.xlu0 0
        %451 = vperm.xlu0 %450, %v421
        %v452 = vpop.permute.xlu0 %451
        %455 = vset.pattern.permute.xlu0 0
        %456 = vperm.xlu0 %455, %v422
        %v457 = vpop.permute.xlu0 %456
        %460 = vset.pattern.permute.xlu0 0
        %461 = vperm.xlu0 %460, %v423
        %v462 = vpop.permute.xlu0 %461
        %v472 = vunpack.c.l.b16 %v408
        %v473 = vunpack.c.l.b16 %v409
        %v474 = vunpack.c.l.b16 %v410
        %v475 = vunpack.c.l.b16 %v411
        %v476 = vunpack.c.l.b16 %v412
        %v477 = vunpack.c.l.b16 %v413
        %v478 = vunpack.c.l.b16 %v414
        %v479 = vunpack.c.l.b16 %v415
        %v480 = vpack.c.b16 %v473, %v472
        %v481 = vpack.c.b16 %v475, %v474
        %v482 = vpack.c.b16 %v477, %v476
        %v483 = vpack.c.b16 %v479, %v478
        %vm484 = vcmask 31744
        %v486 = vsel %vm484, %v480, 0
        %v489 = vsel %vm484, %v481, 0
        %v492 = vsel %vm484, %v482, 0
        %v495 = vsel %vm484, %v483, 0
        %vm497 = vcmask 1041408
        %v499 = vsel %vm497, %v404, 0
        %v502 = vsel %vm497, %v405, 0
        %v505 = vsel %vm497, %v406, 0
        %v508 = vsel %vm497, %v407, 0
        %510 = vmatpush.bf16.msra.mxu0 0
        %511 = vmatpush.bf16.msra.mxu0 0
        %512 = vmatpush.bf16.msra.mxu0 0
        %513 = vmatpush.bf16.msra.mxu0 0
        %514 = vmatpush.bf16.msra.mxu0 0
        %515 = vmatpush.bf16.msra.mxu0 0
        %516 = vmatpush.bf16.msra.mxu0 0
        %517 = vmatpush.bf16.msra.mxu0 %v499
        %518 = vmatmul.bf16.gmra.mxu0 %v486
        %v519 = vpop.f32.mrf.mxu0
        %v520 = vadd.f32 %v427, %v519
        %v521 = vpop.f32.mrf.mxu0
        %v522 = vadd.f32 %v432, %v521
        %523 = vmatmul.bf16.gmra.mxu0 %v489
        %v524 = vpop.f32.mrf.mxu0
        %v525 = vadd.f32 %v437, %v524
        %v526 = vpop.f32.mrf.mxu0
        %v527 = vadd.f32 %v442, %v526
        %528 = vmatmul.bf16.gmra.mxu0 %v492
        %v529 = vpop.f32.mrf.mxu0
        %v530 = vadd.f32 %v447, %v529
        %v531 = vpop.f32.mrf.mxu0
        %v532 = vadd.f32 %v452, %v531
        %533 = vmatmul.bf16.gmra.mxu0 %v495
        %v534 = vpop.f32.mrf.mxu0
        %v535 = vadd.f32 %v457, %v534
        %v536 = vpop.f32.mrf.mxu0
        %v537 = vadd.f32 %v462, %v536
        %538 = vdwg.mxu0
        %539 = vmatpush.bf16.msra.mxu0 0
        %540 = vmatpush.bf16.msra.mxu0 0
        %541 = vmatpush.bf16.msra.mxu0 0
        %542 = vmatpush.bf16.msra.mxu0 0
        %543 = vmatpush.bf16.msra.mxu0 0
        %544 = vmatpush.bf16.msra.mxu0 0
        %545 = vmatpush.bf16.msra.mxu0 0
        %546 = vmatpush.bf16.msra.mxu0 %v502
        %547 = vmatmul.bf16.gmra.mxu0 %v486
        %v548 = vpop.f32.mrf.mxu0
        %v549 = vadd.f32 %v427, %v548
        %v550 = vpop.f32.mrf.mxu0
        %v551 = vadd.f32 %v432, %v550
        %552 = vmatmul.bf16.gmra.mxu0 %v489
        %v553 = vpop.f32.mrf.mxu0
        %v554 = vadd.f32 %v437, %v553
        %v555 = vpop.f32.mrf.mxu0
        %v556 = vadd.f32 %v442, %v555
        %557 = vmatmul.bf16.gmra.mxu0 %v492
        %v558 = vpop.f32.mrf.mxu0
        %v559 = vadd.f32 %v447, %v558
        %v560 = vpop.f32.mrf.mxu0
        %v561 = vadd.f32 %v452, %v560
        %562 = vmatmul.bf16.gmra.mxu0 %v495
        %v563 = vpop.f32.mrf.mxu0
        %v564 = vadd.f32 %v457, %v563
        %v565 = vpop.f32.mrf.mxu0
        %v566 = vadd.f32 %v462, %v565
        %567 = vdwg.mxu0
        %568 = vmatpush.bf16.msra.mxu0 0
        %569 = vmatpush.bf16.msra.mxu0 0
        %570 = vmatpush.bf16.msra.mxu0 0
        %571 = vmatpush.bf16.msra.mxu0 0
        %572 = vmatpush.bf16.msra.mxu0 0
        %573 = vmatpush.bf16.msra.mxu0 0
        %574 = vmatpush.bf16.msra.mxu0 0
        %575 = vmatpush.bf16.msra.mxu0 %v505
        %576 = vmatmul.bf16.gmra.mxu0 %v486
        %v577 = vpop.f32.mrf.mxu0
        %v578 = vadd.f32 %v427, %v577
        %v579 = vpop.f32.mrf.mxu0
        %v580 = vadd.f32 %v432, %v579
        %581 = vmatmul.bf16.gmra.mxu0 %v489
        %v582 = vpop.f32.mrf.mxu0
        %v583 = vadd.f32 %v437, %v582
        %v584 = vpop.f32.mrf.mxu0
        %v585 = vadd.f32 %v442, %v584
        %586 = vmatmul.bf16.gmra.mxu0 %v492
        %v587 = vpop.f32.mrf.mxu0
        %v588 = vadd.f32 %v447, %v587
        %v589 = vpop.f32.mrf.mxu0
        %v590 = vadd.f32 %v452, %v589
        %591 = vmatmul.bf16.gmra.mxu0 %v495
        %v592 = vpop.f32.mrf.mxu0
        %v593 = vadd.f32 %v457, %v592
        %v594 = vpop.f32.mrf.mxu0
        %v595 = vadd.f32 %v462, %v594
        %596 = vdwg.mxu0
        %597 = vmatpush.bf16.msra.mxu0 0
        %598 = vmatpush.bf16.msra.mxu0 0
        %599 = vmatpush.bf16.msra.mxu0 0
        %600 = vmatpush.bf16.msra.mxu0 0
        %601 = vmatpush.bf16.msra.mxu0 0
        %602 = vmatpush.bf16.msra.mxu0 0
        %603 = vmatpush.bf16.msra.mxu0 0
        %604 = vmatpush.bf16.msra.mxu0 %v508
        %605 = vmatmul.bf16.gmra.mxu0 %v486
        %v606 = vpop.f32.mrf.mxu0
        %v607 = vadd.f32 %v427, %v606
        %v608 = vpop.f32.mrf.mxu0
        %v609 = vadd.f32 %v432, %v608
        %610 = vmatmul.bf16.gmra.mxu0 %v489
        %v611 = vpop.f32.mrf.mxu0
        %v612 = vadd.f32 %v437, %v611
        %v613 = vpop.f32.mrf.mxu0
        %v614 = vadd.f32 %v442, %v613
        %615 = vmatmul.bf16.gmra.mxu0 %v492
        %v616 = vpop.f32.mrf.mxu0
        %v617 = vadd.f32 %v447, %v616
        %v618 = vpop.f32.mrf.mxu0
        %v619 = vadd.f32 %v452, %v618
        %620 = vmatmul.bf16.gmra.mxu0 %v495
        %v621 = vpop.f32.mrf.mxu0
        %v622 = vadd.f32 %v457, %v621
        %v623 = vpop.f32.mrf.mxu0
        %v624 = vadd.f32 %v462, %v623
        %625 = vdwg.mxu0
        %v626 = vld [vmem:[%s3] sm:$0xf]
        %v627 = vld [vmem:[%s3 + $0x4] sm:$0xf]
        %v628 = vld [vmem:[%s3 + $0x8] sm:$0xf]
        %v629 = vld [vmem:[%s3 + $0xc] sm:$0xf]
        %v630 = vpack.c.bf16 %v522, %v520
        %v631 = vpack.c.bf16 %v551, %v549
        %v632 = vpack.c.bf16 %v580, %v578
        %v633 = vpack.c.bf16 %v609, %v607
        %v634 = vpack.c.bf16 %v527, %v525
        %v635 = vpack.c.bf16 %v556, %v554
        %v636 = vpack.c.bf16 %v585, %v583
        %v637 = vpack.c.bf16 %v614, %v612
        %v638 = vld [vmem:[%s4] sm:$0xff]
        %v639 = vld [vmem:[%s4 + $0x8] sm:$0xff]
        %v640 = vld [vmem:[%s4 + $0x10] sm:$0xff]
        %v641 = vld [vmem:[%s4 + $0x18] sm:$0xff]
        %643 = vset.pattern.permute.xlu0 0
        %644 = vperm.xlu0 %643, %v638
        %v645 = vpop.permute.xlu0 %644
        %648 = vset.pattern.permute.xlu0 0
        %649 = vperm.xlu0 %648, %v639
        %v650 = vpop.permute.xlu0 %649
        %653 = vset.pattern.permute.xlu0 0
        %654 = vperm.xlu0 %653, %v640
        %v655 = vpop.permute.xlu0 %654
        %658 = vset.pattern.permute.xlu0 0
        %659 = vperm.xlu0 %658, %v641
        %v660 = vpop.permute.xlu0 %659
        %v666 = vunpack.c.l.b16 %v626
        %v667 = vunpack.c.l.b16 %v627
        %v668 = vunpack.c.l.b16 %v628
        %v669 = vunpack.c.l.b16 %v629
        %v670 = vpack.c.b16 %v667, %v666
        %v671 = vpack.c.b16 %v669, %v668
        %vm672 = vcmask 261120
        %v674 = vsel %vm672, %v670, 0
        %v677 = vsel %vm672, %v671, 0
        %679 = vmatpush.bf16.msra.mxu0 0
        %680 = vmatpush.bf16.msra.mxu0 0
        %681 = vmatpush.bf16.msra.mxu0 0
        %682 = vmatpush.bf16.msra.mxu0 0
        %683 = vmatpush.bf16.msra.mxu0 0
        %684 = vmatpush.bf16.msra.mxu0 0
        %685 = vmatpush.bf16.msra.mxu0 %v634
        %686 = vmatpush.bf16.msra.mxu0 %v630
        %687 = vmatmul.bf16.gmra.mxu0 %v674
        %v688 = vpop.f32.mrf.mxu0
        %v689 = vadd.f32 %v645, %v688
        %v690 = vpop.f32.mrf.mxu0
        %v691 = vadd.f32 %v650, %v690
        %692 = vmatmul.bf16.gmra.mxu0 %v677
        %v693 = vpop.f32.mrf.mxu0
        %v694 = vadd.f32 %v655, %v693
        %v695 = vpop.f32.mrf.mxu0
        %v696 = vadd.f32 %v660, %v695
        %697 = vdwg.mxu0
        %698 = vmatpush.bf16.msra.mxu0 0
        %699 = vmatpush.bf16.msra.mxu0 0
        %700 = vmatpush.bf16.msra.mxu0 0
        %701 = vmatpush.bf16.msra.mxu0 0
        %702 = vmatpush.bf16.msra.mxu0 0
        %703 = vmatpush.bf16.msra.mxu0 0
        %704 = vmatpush.bf16.msra.mxu0 %v635
        %705 = vmatpush.bf16.msra.mxu0 %v631
        %706 = vmatmul.bf16.gmra.mxu0 %v674
        %v707 = vpop.f32.mrf.mxu0
        %v708 = vadd.f32 %v645, %v707
        %v709 = vpop.f32.mrf.mxu0
        %v710 = vadd.f32 %v650, %v709
        %711 = vmatmul.bf16.gmra.mxu0 %v677
        %v712 = vpop.f32.mrf.mxu0
        %v713 = vadd.f32 %v655, %v712
        %v714 = vpop.f32.mrf.mxu0
        %v715 = vadd.f32 %v660, %v714
        %716 = vdwg.mxu0
        %717 = vmatpush.bf16.msra.mxu0 0
        %718 = vmatpush.bf16.msra.mxu0 0
        %719 = vmatpush.bf16.msra.mxu0 0
        %720 = vmatpush.bf16.msra.mxu0 0
        %721 = vmatpush.bf16.msra.mxu0 0
        %722 = vmatpush.bf16.msra.mxu0 0
        %723 = vmatpush.bf16.msra.mxu0 %v636
        %724 = vmatpush.bf16.msra.mxu0 %v632
        %725 = vmatmul.bf16.gmra.mxu0 %v674
        %v726 = vpop.f32.mrf.mxu0
        %v727 = vadd.f32 %v645, %v726
        %v728 = vpop.f32.mrf.mxu0
        %v729 = vadd.f32 %v650, %v728
        %730 = vmatmul.bf16.gmra.mxu0 %v677
        %v731 = vpop.f32.mrf.mxu0
        %v732 = vadd.f32 %v655, %v731
        %v733 = vpop.f32.mrf.mxu0
        %v734 = vadd.f32 %v660, %v733
        %735 = vdwg.mxu0
        %736 = vmatpush.bf16.msra.mxu0 0
        %737 = vmatpush.bf16.msra.mxu0 0
        %738 = vmatpush.bf16.msra.mxu0 0
        %739 = vmatpush.bf16.msra.mxu0 0
        %740 = vmatpush.bf16.msra.mxu0 0
        %741 = vmatpush.bf16.msra.mxu0 0
        %742 = vmatpush.bf16.msra.mxu0 %v637
        %743 = vmatpush.bf16.msra.mxu0 %v633
        %744 = vmatmul.bf16.gmra.mxu0 %v674
        %v745 = vpop.f32.mrf.mxu0
        %v746 = vadd.f32 %v645, %v745
        %v747 = vpop.f32.mrf.mxu0
        %v748 = vadd.f32 %v650, %v747
        %749 = vmatmul.bf16.gmra.mxu0 %v677
        %v750 = vpop.f32.mrf.mxu0
        %v751 = vadd.f32 %v655, %v750
        %v752 = vpop.f32.mrf.mxu0
        %v753 = vadd.f32 %v660, %v752
        %754 = vdwg.mxu0
        %v755 = vtanh.pop %v689
        %v756 = vtanh.pop %v708
        %v757 = vtanh.pop %v727
        %v758 = vtanh.pop %v746
        %v759 = vtanh.pop %v691
        %v760 = vtanh.pop %v710
        %v761 = vtanh.pop %v729
        %v762 = vtanh.pop %v748
        %v763 = vtanh.pop %v694
        %v764 = vtanh.pop %v713
        %v765 = vtanh.pop %v732
        %v766 = vtanh.pop %v751
        %v767 = vtanh.pop %v696
        %v768 = vtanh.pop %v715
        %v769 = vtanh.pop %v734
        %v770 = vtanh.pop %v753
        %v771 = vpack.c.bf16 %v756, %v755
        %v772 = vpack.c.bf16 %v758, %v757
        %v773 = vpack.c.bf16 %v760, %v759
        %v774 = vpack.c.bf16 %v762, %v761
        %v775 = vpack.c.bf16 %v764, %v763
        %v776 = vpack.c.bf16 %v766, %v765
        %v777 = vpack.c.bf16 %v768, %v767
        %v778 = vpack.c.bf16 %v770, %v769
        %779 = vst [vmem:[#allocation2] sm:$0xff] %v771
        %780 = vst [vmem:[#allocation2 + $0x8] sm:$0xff] %v772
        %781 = vst [vmem:[#allocation2 + $0x10] sm:$0xff] %v773
        %782 = vst [vmem:[#allocation2 + $0x18] sm:$0xff] %v774
        %783 = vst [vmem:[#allocation2 + $0x20] sm:$0xff] %v775
        %784 = vst [vmem:[#allocation2 + $0x28] sm:$0xff] %v776
        %785 = vst [vmem:[#allocation2 + $0x30] sm:$0xff] %v777
        %786 = vst [vmem:[#allocation2 + $0x38] sm:$0xff] %v778
        %v787 = vpack.c.bf16 %v559, %v530
        %v788 = vpack.c.bf16 %v617, %v588
        %v789 = vpack.c.bf16 %v561, %v532
        %v790 = vpack.c.bf16 %v619, %v590
        %v791 = vpack.c.bf16 %v564, %v535
        %v792 = vpack.c.bf16 %v622, %v593
        %v793 = vpack.c.bf16 %v566, %v537
        %v794 = vpack.c.bf16 %v624, %v595
        %795 = vst [vmem:[#allocation2 + $0x40] sm:$0xff] %v787
        %796 = vst [vmem:[#allocation2 + $0x48] sm:$0xff] %v788
        %797 = vst [vmem:[#allocation2 + $0x50] sm:$0xff] %v789
        %798 = vst [vmem:[#allocation2 + $0x58] sm:$0xff] %v790
        %799 = vst [vmem:[#allocation2 + $0x60] sm:$0xff] %v791
        %800 = vst [vmem:[#allocation2 + $0x68] sm:$0xff] %v792
        %801 = vst [vmem:[#allocation2 + $0x70] sm:$0xff] %v793
        %802 = vst [vmem:[#allocation2 + $0x78] sm:$0xff] %v794
        %v803 = vld [vmem:[%s5] sm:$0xf]
        %v804 = vld [vmem:[%s5 + $0x4] sm:$0xf]
        %v805 = vld [vmem:[%s5 + $0x8] sm:$0xf]
        %v806 = vld [vmem:[%s5 + $0xc] sm:$0xf]
        %v807 = vld [vmem:[#allocation2] sm:$0xff]
        %v808 = vld [vmem:[#allocation2 + $0x8] sm:$0xff]
        %v809 = vld [vmem:[#allocation2 + $0x10] sm:$0xff]
        %v810 = vld [vmem:[#allocation2 + $0x18] sm:$0xff]
        %v811 = vld [vmem:[#allocation2 + $0x20] sm:$0xff]
        %v812 = vld [vmem:[#allocation2 + $0x28] sm:$0xff]
        %v813 = vld [vmem:[#allocation2 + $0x30] sm:$0xff]
        %v814 = vld [vmem:[#allocation2 + $0x38] sm:$0xff]
        %v815 = vld [vmem:[#allocation2 + $0x40] sm:$0xff]
        %v816 = vld [vmem:[#allocation2 + $0x48] sm:$0xff]
        %v817 = vld [vmem:[#allocation2 + $0x50] sm:$0xff]
        %v818 = vld [vmem:[#allocation2 + $0x58] sm:$0xff]
        %v819 = vld [vmem:[#allocation2 + $0x60] sm:$0xff]
        %v820 = vld [vmem:[#allocation2 + $0x68] sm:$0xff]
        %v821 = vld [vmem:[#allocation2 + $0x70] sm:$0xff]
        %v822 = vld [vmem:[#allocation2 + $0x78] sm:$0xff]
        %v823 = vld [vmem:[%s6] sm:$0xff]
        %v824 = vld [vmem:[%s6 + $0x8] sm:$0xff]
        %v825 = vld [vmem:[%s6 + $0x10] sm:$0xff]
        %v826 = vld [vmem:[%s6 + $0x18] sm:$0xff]
        %828 = vset.pattern.permute.xlu0 0
        %829 = vperm.xlu0 %828, %v823
        %v830 = vpop.permute.xlu0 %829
        %833 = vset.pattern.permute.xlu0 0
        %834 = vperm.xlu0 %833, %v824
        %v835 = vpop.permute.xlu0 %834
        %838 = vset.pattern.permute.xlu0 0
        %839 = vperm.xlu0 %838, %v825
        %v840 = vpop.permute.xlu0 %839
        %843 = vset.pattern.permute.xlu0 0
        %844 = vperm.xlu0 %843, %v826
        %v845 = vpop.permute.xlu0 %844
        %v851 = vunpack.c.l.b16 %v803
        %v852 = vunpack.c.l.b16 %v804
        %v853 = vunpack.c.l.b16 %v805
        %v854 = vunpack.c.l.b16 %v806
        %v855 = vpack.c.b16 %v852, %v851
        %v856 = vpack.c.b16 %v854, %v853
        %v873 = vunpack.c.l.b16 %v807
        %v874 = vunpack.c.h.b16 %v807
        %v875 = vunpack.c.l.b16 %v808
        %v876 = vunpack.c.h.b16 %v808
        %v877 = vunpack.c.l.b16 %v809
        %v878 = vunpack.c.h.b16 %v809
        %v879 = vunpack.c.l.b16 %v810
        %v880 = vunpack.c.h.b16 %v810
        %v881 = vunpack.c.l.b16 %v811
        %v882 = vunpack.c.h.b16 %v811
        %v883 = vunpack.c.l.b16 %v812
        %v884 = vunpack.c.h.b16 %v812
        %v885 = vunpack.c.l.b16 %v813
        %v886 = vunpack.c.h.b16 %v813
        %v887 = vunpack.c.l.b16 %v814
        %v888 = vunpack.c.h.b16 %v814
        %v889 = vunpack.c.l.b16 %v815
        %v890 = vunpack.c.h.b16 %v815
        %v891 = vunpack.c.l.b16 %v816
        %v892 = vunpack.c.h.b16 %v816
        %v893 = vunpack.c.l.b16 %v817
        %v894 = vunpack.c.h.b16 %v817
        %v895 = vunpack.c.l.b16 %v818
        %v896 = vunpack.c.h.b16 %v818
        %v897 = vunpack.c.l.b16 %v819
        %v898 = vunpack.c.h.b16 %v819
        %v899 = vunpack.c.l.b16 %v820
        %v900 = vunpack.c.h.b16 %v820
        %v901 = vunpack.c.l.b16 %v821
        %v902 = vunpack.c.h.b16 %v821
        %v903 = vunpack.c.l.b16 %v822
        %v904 = vunpack.c.h.b16 %v822
        %v905 = vpack.c.b16 %v877, %v873
        %v906 = vpack.c.b16 %v878, %v874
        %v907 = vpack.c.b16 %v879, %v875
        %v908 = vpack.c.b16 %v880, %v876
        %v909 = vpack.c.b16 %v885, %v881
        %v910 = vpack.c.b16 %v886, %v882
        %v911 = vpack.c.b16 %v887, %v883
        %v912 = vpack.c.b16 %v888, %v884
        %v913 = vpack.c.b16 %v893, %v889
        %v914 = vpack.c.b16 %v894, %v890
        %v915 = vpack.c.b16 %v895, %v891
        %v916 = vpack.c.b16 %v896, %v892
        %v917 = vpack.c.b16 %v901, %v897
        %v918 = vpack.c.b16 %v902, %v898
        %v919 = vpack.c.b16 %v903, %v899
        %v920 = vpack.c.b16 %v904, %v900
        %vm937 = vcmask 523264
        %v939 = vsel %vm937, %v855, 0
        %v942 = vsel %vm937, %v856, 0
        %944 = vmatpush.bf16.msra.mxu0 0
        %945 = vmatpush.bf16.msra.mxu0 0
        %946 = vmatpush.bf16.msra.mxu0 0
        %947 = vmatpush.bf16.msra.mxu0 0
        %948 = vmatpush.bf16.msra.mxu0 %v917
        %949 = vmatpush.bf16.msra.mxu0 %v913
        %950 = vmatpush.bf16.msra.mxu0 %v909
        %951 = vmatpush.bf16.msra.mxu0 %v905
        %952 = vmatmul.bf16.gmra.mxu0 %v939
        %v953 = vpop.f32.mrf.mxu0
        %v954 = vadd.f32 %v830, %v953
        %v955 = vpop.f32.mrf.mxu0
        %v956 = vadd.f32 %v835, %v955
        %957 = vmatmul.bf16.gmra.mxu0 %v942
        %v958 = vpop.f32.mrf.mxu0
        %v959 = vadd.f32 %v840, %v958
        %v960 = vpop.f32.mrf.mxu0
        %v961 = vadd.f32 %v845, %v960
        %962 = vdwg.mxu0
        %963 = vmatpush.bf16.msra.mxu0 0
        %964 = vmatpush.bf16.msra.mxu0 0
        %965 = vmatpush.bf16.msra.mxu0 0
        %966 = vmatpush.bf16.msra.mxu0 0
        %967 = vmatpush.bf16.msra.mxu0 %v918
        %968 = vmatpush.bf16.msra.mxu0 %v914
        %969 = vmatpush.bf16.msra.mxu0 %v910
        %970 = vmatpush.bf16.msra.mxu0 %v906
        %971 = vmatmul.bf16.gmra.mxu0 %v939
        %v972 = vpop.f32.mrf.mxu0
        %v973 = vadd.f32 %v830, %v972
        %v974 = vpop.f32.mrf.mxu0
        %v975 = vadd.f32 %v835, %v974
        %976 = vmatmul.bf16.gmra.mxu0 %v942
        %v977 = vpop.f32.mrf.mxu0
        %v978 = vadd.f32 %v840, %v977
        %v979 = vpop.f32.mrf.mxu0
        %v980 = vadd.f32 %v845, %v979
        %981 = vdwg.mxu0
        %982 = vmatpush.bf16.msra.mxu0 0
        %983 = vmatpush.bf16.msra.mxu0 0
        %984 = vmatpush.bf16.msra.mxu0 0
        %985 = vmatpush.bf16.msra.mxu0 0
        %986 = vmatpush.bf16.msra.mxu0 %v919
        %987 = vmatpush.bf16.msra.mxu0 %v915
        %988 = vmatpush.bf16.msra.mxu0 %v911
        %989 = vmatpush.bf16.msra.mxu0 %v907
        %990 = vmatmul.bf16.gmra.mxu0 %v939
        %v991 = vpop.f32.mrf.mxu0
        %v992 = vadd.f32 %v830, %v991
        %v993 = vpop.f32.mrf.mxu0
        %v994 = vadd.f32 %v835, %v993
        %995 = vmatmul.bf16.gmra.mxu0 %v942
        %v996 = vpop.f32.mrf.mxu0
        %v997 = vadd.f32 %v840, %v996
        %v998 = vpop.f32.mrf.mxu0
        %v999 = vadd.f32 %v845, %v998
        %1000 = vdwg.mxu0
        %1001 = vmatpush.bf16.msra.mxu0 0
        %1002 = vmatpush.bf16.msra.mxu0 0
        %1003 = vmatpush.bf16.msra.mxu0 0
        %1004 = vmatpush.bf16.msra.mxu0 0
        %1005 = vmatpush.bf16.msra.mxu0 %v920
        %1006 = vmatpush.bf16.msra.mxu0 %v916
        %1007 = vmatpush.bf16.msra.mxu0 %v912
        %1008 = vmatpush.bf16.msra.mxu0 %v908
        %1009 = vmatmul.bf16.gmra.mxu0 %v939
        %v1010 = vpop.f32.mrf.mxu0
        %v1011 = vadd.f32 %v830, %v1010
        %v1012 = vpop.f32.mrf.mxu0
        %v1013 = vadd.f32 %v835, %v1012
        %1014 = vmatmul.bf16.gmra.mxu0 %v942
        %v1015 = vpop.f32.mrf.mxu0
        %v1016 = vadd.f32 %v840, %v1015
        %v1017 = vpop.f32.mrf.mxu0
        %v1018 = vadd.f32 %v845, %v1017
        %1019 = vdwg.mxu0
        %v1020 = vtanh.pop %v954
        %v1021 = vtanh.pop %v973
        %v1022 = vtanh.pop %v992
        %v1023 = vtanh.pop %v1011
        %v1024 = vtanh.pop %v956
        %v1025 = vtanh.pop %v975
        %v1026 = vtanh.pop %v994
        %v1027 = vtanh.pop %v1013
        %v1028 = vtanh.pop %v959
        %v1029 = vtanh.pop %v978
        %v1030 = vtanh.pop %v997
        %v1031 = vtanh.pop %v1016
        %v1032 = vtanh.pop %v961
        %v1033 = vtanh.pop %v980
        %v1034 = vtanh.pop %v999
        %v1035 = vtanh.pop %v1018
        %v1036 = vpack.c.bf16 %v1021, %v1020
        %v1037 = vpack.c.bf16 %v1023, %v1022
        %v1038 = vpack.c.bf16 %v1025, %v1024
        %v1039 = vpack.c.bf16 %v1027, %v1026
        %v1040 = vpack.c.bf16 %v1029, %v1028
        %v1041 = vpack.c.bf16 %v1031, %v1030
        %v1042 = vpack.c.bf16 %v1033, %v1032
        %v1043 = vpack.c.bf16 %v1035, %v1034
        %1044 = vst [vmem:[#allocation2 + $0x40] sm:$0xff] %v1036
        %1045 = vst [vmem:[#allocation2 + $0x48] sm:$0xff] %v1037
        %1046 = vst [vmem:[#allocation2 + $0x50] sm:$0xff] %v1038
        %1047 = vst [vmem:[#allocation2 + $0x58] sm:$0xff] %v1039
        %1048 = vst [vmem:[#allocation2 + $0x60] sm:$0xff] %v1040
        %1049 = vst [vmem:[#allocation2 + $0x68] sm:$0xff] %v1041
        %1050 = vst [vmem:[#allocation2 + $0x70] sm:$0xff] %v1042
        %1051 = vst [vmem:[#allocation2 + $0x78] sm:$0xff] %v1043
        %v1052 = vld [vmem:[%s7] sm:$0xf]
        %v1053 = vld [vmem:[%s7 + $0x4] sm:$0xf]
        %v1054 = vld [vmem:[%s7 + $0x8] sm:$0xf]
        %v1055 = vld [vmem:[%s7 + $0xc] sm:$0xf]
        %v1056 = vld [vmem:[#allocation2] sm:$0xff]
        %v1057 = vld [vmem:[#allocation2 + $0x8] sm:$0xff]
        %v1058 = vld [vmem:[#allocation2 + $0x10] sm:$0xff]
        %v1059 = vld [vmem:[#allocation2 + $0x18] sm:$0xff]
        %v1060 = vld [vmem:[#allocation2 + $0x20] sm:$0xff]
        %v1061 = vld [vmem:[#allocation2 + $0x28] sm:$0xff]
        %v1062 = vld [vmem:[#allocation2 + $0x30] sm:$0xff]
        %v1063 = vld [vmem:[#allocation2 + $0x38] sm:$0xff]
        %v1064 = vld [vmem:[#allocation2 + $0x40] sm:$0xff]
        %v1065 = vld [vmem:[#allocation2 + $0x48] sm:$0xff]
        %v1066 = vld [vmem:[#allocation2 + $0x50] sm:$0xff]
        %v1067 = vld [vmem:[#allocation2 + $0x58] sm:$0xff]
        %v1068 = vld [vmem:[#allocation2 + $0x60] sm:$0xff]
        %v1069 = vld [vmem:[#allocation2 + $0x68] sm:$0xff]
        %v1070 = vld [vmem:[#allocation2 + $0x70] sm:$0xff]
        %v1071 = vld [vmem:[#allocation2 + $0x78] sm:$0xff]
        %v1072 = vld [vmem:[%s8] sm:$0xff]
        %v1073 = vld [vmem:[%s8 + $0x8] sm:$0xff]
        %v1074 = vld [vmem:[%s8 + $0x10] sm:$0xff]
        %v1075 = vld [vmem:[%s8 + $0x18] sm:$0xff]
        %1077 = vset.pattern.permute.xlu0 0
        %1078 = vperm.xlu0 %1077, %v1072
        %v1079 = vpop.permute.xlu0 %1078
        %1082 = vset.pattern.permute.xlu0 0
        %1083 = vperm.xlu0 %1082, %v1073
        %v1084 = vpop.permute.xlu0 %1083
        %1087 = vset.pattern.permute.xlu0 0
        %1088 = vperm.xlu0 %1087, %v1074
        %v1089 = vpop.permute.xlu0 %1088
        %1092 = vset.pattern.permute.xlu0 0
        %1093 = vperm.xlu0 %1092, %v1075
        %v1094 = vpop.permute.xlu0 %1093
        %v1100 = vunpack.c.l.b16 %v1052
        %v1101 = vunpack.c.l.b16 %v1053
        %v1102 = vunpack.c.l.b16 %v1054
        %v1103 = vunpack.c.l.b16 %v1055
        %v1104 = vpack.c.b16 %v1101, %v1100
        %v1105 = vpack.c.b16 %v1103, %v1102
        %v1122 = vunpack.c.l.b16 %v1056
        %v1123 = vunpack.c.h.b16 %v1056
        %v1124 = vunpack.c.l.b16 %v1057
        %v1125 = vunpack.c.h.b16 %v1057
        %v1126 = vunpack.c.l.b16 %v1058
        %v1127 = vunpack.c.h.b16 %v1058
        %v1128 = vunpack.c.l.b16 %v1059
        %v1129 = vunpack.c.h.b16 %v1059
        %v1130 = vunpack.c.l.b16 %v1060
        %v1131 = vunpack.c.h.b16 %v1060
        %v1132 = vunpack.c.l.b16 %v1061
        %v1133 = vunpack.c.h.b16 %v1061
        %v1134 = vunpack.c.l.b16 %v1062
        %v1135 = vunpack.c.h.b16 %v1062
        %v1136 = vunpack.c.l.b16 %v1063
        %v1137 = vunpack.c.h.b16 %v1063
        %v1138 = vunpack.c.l.b16 %v1064
        %v1139 = vunpack.c.h.b16 %v1064
        %v1140 = vunpack.c.l.b16 %v1065
        %v1141 = vunpack.c.h.b16 %v1065
        %v1142 = vunpack.c.l.b16 %v1066
        %v1143 = vunpack.c.h.b16 %v1066
        %v1144 = vunpack.c.l.b16 %v1067
        %v1145 = vunpack.c.h.b16 %v1067
        %v1146 = vunpack.c.l.b16 %v1068
        %v1147 = vunpack.c.h.b16 %v1068
        %v1148 = vunpack.c.l.b16 %v1069
        %v1149 = vunpack.c.h.b16 %v1069
        %v1150 = vunpack.c.l.b16 %v1070
        %v1151 = vunpack.c.h.b16 %v1070
        %v1152 = vunpack.c.l.b16 %v1071
        %v1153 = vunpack.c.h.b16 %v1071
        %v1154 = vpack.c.b16 %v1126, %v1122
        %v1155 = vpack.c.b16 %v1127, %v1123
        %v1156 = vpack.c.b16 %v1128, %v1124
        %v1157 = vpack.c.b16 %v1129, %v1125
        %v1158 = vpack.c.b16 %v1134, %v1130
        %v1159 = vpack.c.b16 %v1135, %v1131
        %v1160 = vpack.c.b16 %v1136, %v1132
        %v1161 = vpack.c.b16 %v1137, %v1133
        %v1162 = vpack.c.b16 %v1142, %v1138
        %v1163 = vpack.c.b16 %v1143, %v1139
        %v1164 = vpack.c.b16 %v1144, %v1140
        %v1165 = vpack.c.b16 %v1145, %v1141
        %v1166 = vpack.c.b16 %v1150, %v1146
        %v1167 = vpack.c.b16 %v1151, %v1147
        %v1168 = vpack.c.b16 %v1152, %v1148
        %v1169 = vpack.c.b16 %v1153, %v1149
        %v1187 = vsel %vm937, %v1104, 0
        %v1190 = vsel %vm937, %v1105, 0
        %1192 = vmatpush.bf16.msra.mxu0 0
        %1193 = vmatpush.bf16.msra.mxu0 0
        %1194 = vmatpush.bf16.msra.mxu0 0
        %1195 = vmatpush.bf16.msra.mxu0 0
        %1196 = vmatpush.bf16.msra.mxu0 %v1166
        %1197 = vmatpush.bf16.msra.mxu0 %v1162
        %1198 = vmatpush.bf16.msra.mxu0 %v1158
        %1199 = vmatpush.bf16.msra.mxu0 %v1154
        %1200 = vmatmul.bf16.gmra.mxu0 %v1187
        %v1201 = vpop.f32.mrf.mxu0
        %v1202 = vadd.f32 %v1079, %v1201
        %v1203 = vpop.f32.mrf.mxu0
        %v1204 = vadd.f32 %v1084, %v1203
        %1205 = vmatmul.bf16.gmra.mxu0 %v1190
        %v1206 = vpop.f32.mrf.mxu0
        %v1207 = vadd.f32 %v1089, %v1206
        %v1208 = vpop.f32.mrf.mxu0
        %v1209 = vadd.f32 %v1094, %v1208
        %1210 = vdwg.mxu0
        %1211 = vmatpush.bf16.msra.mxu0 0
        %1212 = vmatpush.bf16.msra.mxu0 0
        %1213 = vmatpush.bf16.msra.mxu0 0
        %1214 = vmatpush.bf16.msra.mxu0 0
        %1215 = vmatpush.bf16.msra.mxu0 %v1167
        %1216 = vmatpush.bf16.msra.mxu0 %v1163
        %1217 = vmatpush.bf16.msra.mxu0 %v1159
        %1218 = vmatpush.bf16.msra.mxu0 %v1155
        %1219 = vmatmul.bf16.gmra.mxu0 %v1187
        %v1220 = vpop.f32.mrf.mxu0
        %v1221 = vadd.f32 %v1079, %v1220
        %v1222 = vpop.f32.mrf.mxu0
        %v1223 = vadd.f32 %v1084, %v1222
        %1224 = vmatmul.bf16.gmra.mxu0 %v1190
        %v1225 = vpop.f32.mrf.mxu0
        %v1226 = vadd.f32 %v1089, %v1225
        %v1227 = vpop.f32.mrf.mxu0
        %v1228 = vadd.f32 %v1094, %v1227
        %1229 = vdwg.mxu0
        %1230 = vmatpush.bf16.msra.mxu0 0
        %1231 = vmatpush.bf16.msra.mxu0 0
        %1232 = vmatpush.bf16.msra.mxu0 0
        %1233 = vmatpush.bf16.msra.mxu0 0
        %1234 = vmatpush.bf16.msra.mxu0 %v1168
        %1235 = vmatpush.bf16.msra.mxu0 %v1164
        %1236 = vmatpush.bf16.msra.mxu0 %v1160
        %1237 = vmatpush.bf16.msra.mxu0 %v1156
        %1238 = vmatmul.bf16.gmra.mxu0 %v1187
        %v1239 = vpop.f32.mrf.mxu0
        %v1240 = vadd.f32 %v1079, %v1239
        %v1241 = vpop.f32.mrf.mxu0
        %v1242 = vadd.f32 %v1084, %v1241
        %1243 = vmatmul.bf16.gmra.mxu0 %v1190
        %v1244 = vpop.f32.mrf.mxu0
        %v1245 = vadd.f32 %v1089, %v1244
        %v1246 = vpop.f32.mrf.mxu0
        %v1247 = vadd.f32 %v1094, %v1246
        %1248 = vdwg.mxu0
        %1249 = vmatpush.bf16.msra.mxu0 0
        %1250 = vmatpush.bf16.msra.mxu0 0
        %1251 = vmatpush.bf16.msra.mxu0 0
        %1252 = vmatpush.bf16.msra.mxu0 0
        %1253 = vmatpush.bf16.msra.mxu0 %v1169
        %1254 = vmatpush.bf16.msra.mxu0 %v1165
        %1255 = vmatpush.bf16.msra.mxu0 %v1161
        %1256 = vmatpush.bf16.msra.mxu0 %v1157
        %1257 = vmatmul.bf16.gmra.mxu0 %v1187
        %v1258 = vpop.f32.mrf.mxu0
        %v1259 = vadd.f32 %v1079, %v1258
        %v1260 = vpop.f32.mrf.mxu0
        %v1261 = vadd.f32 %v1084, %v1260
        %1262 = vmatmul.bf16.gmra.mxu0 %v1190
        %v1263 = vpop.f32.mrf.mxu0
        %v1264 = vadd.f32 %v1089, %v1263
        %v1265 = vpop.f32.mrf.mxu0
        %v1266 = vadd.f32 %v1094, %v1265
        %1267 = vdwg.mxu0
        %v1268 = vtanh.pop %v1202
        %v1269 = vtanh.pop %v1221
        %v1270 = vtanh.pop %v1240
        %v1271 = vtanh.pop %v1259
        %v1272 = vtanh.pop %v1204
        %v1273 = vtanh.pop %v1223
        %v1274 = vtanh.pop %v1242
        %v1275 = vtanh.pop %v1261
        %v1276 = vtanh.pop %v1207
        %v1277 = vtanh.pop %v1226
        %v1278 = vtanh.pop %v1245
        %v1279 = vtanh.pop %v1264
        %v1280 = vtanh.pop %v1209
        %v1281 = vtanh.pop %v1228
        %v1282 = vtanh.pop %v1247
        %v1283 = vtanh.pop %v1266
        %v1284 = vpack.c.bf16 %v1269, %v1268
        %v1285 = vpack.c.bf16 %v1271, %v1270
        %v1286 = vpack.c.bf16 %v1273, %v1272
        %v1287 = vpack.c.bf16 %v1275, %v1274
        %v1288 = vpack.c.bf16 %v1277, %v1276
        %v1289 = vpack.c.bf16 %v1279, %v1278
        %v1290 = vpack.c.bf16 %v1281, %v1280
        %v1291 = vpack.c.bf16 %v1283, %v1282
        %1292 = vst [vmem:[#allocation2 + $0x40] sm:$0xff] %v1284
        %1293 = vst [vmem:[#allocation2 + $0x48] sm:$0xff] %v1285
        %1294 = vst [vmem:[#allocation2 + $0x50] sm:$0xff] %v1286
        %1295 = vst [vmem:[#allocation2 + $0x58] sm:$0xff] %v1287
        %1296 = vst [vmem:[#allocation2 + $0x60] sm:$0xff] %v1288
        %1297 = vst [vmem:[#allocation2 + $0x68] sm:$0xff] %v1289
        %1298 = vst [vmem:[#allocation2 + $0x70] sm:$0xff] %v1290
        %1299 = vst [vmem:[#allocation2 + $0x78] sm:$0xff] %v1291
        %v1300 = vld [vmem:[%s9] sm:$0xf]
        %v1301 = vld [vmem:[#allocation2] sm:$0xff]
        %v1302 = vld [vmem:[#allocation2 + $0x8] sm:$0xff]
        %v1303 = vld [vmem:[#allocation2 + $0x10] sm:$0xff]
        %v1304 = vld [vmem:[#allocation2 + $0x18] sm:$0xff]
        %v1305 = vld [vmem:[#allocation2 + $0x20] sm:$0xff]
        %v1306 = vld [vmem:[#allocation2 + $0x28] sm:$0xff]
        %v1307 = vld [vmem:[#allocation2 + $0x30] sm:$0xff]
        %v1308 = vld [vmem:[#allocation2 + $0x38] sm:$0xff]
        %v1309 = vld [vmem:[#allocation2 + $0x40] sm:$0xff]
        %v1310 = vld [vmem:[#allocation2 + $0x48] sm:$0xff]
        %v1311 = vld [vmem:[#allocation2 + $0x50] sm:$0xff]
        %v1312 = vld [vmem:[#allocation2 + $0x58] sm:$0xff]
        %v1313 = vld [vmem:[#allocation2 + $0x60] sm:$0xff]
        %v1314 = vld [vmem:[#allocation2 + $0x68] sm:$0xff]
        %v1315 = vld [vmem:[#allocation2 + $0x70] sm:$0xff]
        %v1316 = vld [vmem:[#allocation2 + $0x78] sm:$0xff]
        %v1317 = vld [vmem:[%s10] sm:$0xff]
        %1319 = vset.pattern.permute.xlu0 0
        %1320 = vperm.xlu0 %1319, %v1317
        %v1321 = vpop.permute.xlu0 %1320
        %v1339 = vunpack.c.l.b16 %v1301
        %v1340 = vunpack.c.h.b16 %v1301
        %v1341 = vunpack.c.l.b16 %v1302
        %v1342 = vunpack.c.h.b16 %v1302
        %v1343 = vunpack.c.l.b16 %v1303
        %v1344 = vunpack.c.h.b16 %v1303
        %v1345 = vunpack.c.l.b16 %v1304
        %v1346 = vunpack.c.h.b16 %v1304
        %v1347 = vunpack.c.l.b16 %v1305
        %v1348 = vunpack.c.h.b16 %v1305
        %v1349 = vunpack.c.l.b16 %v1306
        %v1350 = vunpack.c.h.b16 %v1306
        %v1351 = vunpack.c.l.b16 %v1307
        %v1352 = vunpack.c.h.b16 %v1307
        %v1353 = vunpack.c.l.b16 %v1308
        %v1354 = vunpack.c.h.b16 %v1308
        %v1355 = vunpack.c.l.b16 %v1309
        %v1356 = vunpack.c.h.b16 %v1309
        %v1357 = vunpack.c.l.b16 %v1310
        %v1358 = vunpack.c.h.b16 %v1310
        %v1359 = vunpack.c.l.b16 %v1311
        %v1360 = vunpack.c.h.b16 %v1311
        %v1361 = vunpack.c.l.b16 %v1312
        %v1362 = vunpack.c.h.b16 %v1312
        %v1363 = vunpack.c.l.b16 %v1313
        %v1364 = vunpack.c.h.b16 %v1313
        %v1365 = vunpack.c.l.b16 %v1314
        %v1366 = vunpack.c.h.b16 %v1314
        %v1367 = vunpack.c.l.b16 %v1315
        %v1368 = vunpack.c.h.b16 %v1315
        %v1369 = vunpack.c.l.b16 %v1316
        %v1370 = vunpack.c.h.b16 %v1316
        %v1371 = vpack.c.b16 %v1343, %v1339
        %v1372 = vpack.c.b16 %v1344, %v1340
        %v1373 = vpack.c.b16 %v1345, %v1341
        %v1374 = vpack.c.b16 %v1346, %v1342
        %v1375 = vpack.c.b16 %v1351, %v1347
        %v1376 = vpack.c.b16 %v1352, %v1348
        %v1377 = vpack.c.b16 %v1353, %v1349
        %v1378 = vpack.c.b16 %v1354, %v1350
        %v1379 = vpack.c.b16 %v1359, %v1355
        %v1380 = vpack.c.b16 %v1360, %v1356
        %v1381 = vpack.c.b16 %v1361, %v1357
        %v1382 = vpack.c.b16 %v1362, %v1358
        %v1383 = vpack.c.b16 %v1367, %v1363
        %v1384 = vpack.c.b16 %v1368, %v1364
        %v1385 = vpack.c.b16 %v1369, %v1365
        %v1386 = vpack.c.b16 %v1370, %v1366
        %v1404 = vsel %vm937, %v1300, 0
        %1406 = vmatpush.bf16.msra.mxu0 0
        %1407 = vmatpush.bf16.msra.mxu0 0
        %1408 = vmatpush.bf16.msra.mxu0 0
        %1409 = vmatpush.bf16.msra.mxu0 0
        %1410 = vmatpush.bf16.msra.mxu0 %v1383
        %1411 = vmatpush.bf16.msra.mxu0 %v1379
        %1412 = vmatpush.bf16.msra.mxu0 %v1375
        %1413 = vmatpush.bf16.msra.mxu0 %v1371
        %1414 = vmatmul.bf16.gmra.mxu0 %v1404
        %v1415 = vpop.f32.mrf.mxu0
        %v1416 = vadd.f32 %v1321, %v1415
        %v1417 = vpop.f32.mrf.mxu0
        %1418 = vdwg.mxu0
        %1419 = vmatpush.bf16.msra.mxu0 0
        %1420 = vmatpush.bf16.msra.mxu0 0
        %1421 = vmatpush.bf16.msra.mxu0 0
        %1422 = vmatpush.bf16.msra.mxu0 0
        %1423 = vmatpush.bf16.msra.mxu0 %v1384
        %1424 = vmatpush.bf16.msra.mxu0 %v1380
        %1425 = vmatpush.bf16.msra.mxu0 %v1376
        %1426 = vmatpush.bf16.msra.mxu0 %v1372
        %1427 = vmatmul.bf16.gmra.mxu0 %v1404
        %v1428 = vpop.f32.mrf.mxu0
        %v1429 = vadd.f32 %v1321, %v1428
        %v1430 = vpop.f32.mrf.mxu0
        %1431 = vdwg.mxu0
        %1432 = vmatpush.bf16.msra.mxu0 0
        %1433 = vmatpush.bf16.msra.mxu0 0
        %1434 = vmatpush.bf16.msra.mxu0 0
        %1435 = vmatpush.bf16.msra.mxu0 0
        %1436 = vmatpush.bf16.msra.mxu0 %v1385
        %1437 = vmatpush.bf16.msra.mxu0 %v1381
        %1438 = vmatpush.bf16.msra.mxu0 %v1377
        %1439 = vmatpush.bf16.msra.mxu0 %v1373
        %1440 = vmatmul.bf16.gmra.mxu0 %v1404
        %v1441 = vpop.f32.mrf.mxu0
        %v1442 = vadd.f32 %v1321, %v1441
        %v1443 = vpop.f32.mrf.mxu0
        %1444 = vdwg.mxu0
        %1445 = vmatpush.bf16.msra.mxu0 0
        %1446 = vmatpush.bf16.msra.mxu0 0
        %1447 = vmatpush.bf16.msra.mxu0 0
        %1448 = vmatpush.bf16.msra.mxu0 0
        %1449 = vmatpush.bf16.msra.mxu0 %v1386
        %1450 = vmatpush.bf16.msra.mxu0 %v1382
        %1451 = vmatpush.bf16.msra.mxu0 %v1378
        %1452 = vmatpush.bf16.msra.mxu0 %v1374
        %1453 = vmatmul.bf16.gmra.mxu0 %v1404
        %v1454 = vpop.f32.mrf.mxu0
        %v1455 = vadd.f32 %v1321, %v1454
        %v1456 = vpop.f32.mrf.mxu0
        %1457 = vdwg.mxu0
        %1458 = vst [vmem:[%s380] sm:$0xff] %v1416
        %1459 = vst [vmem:[%s380 + $0x8] sm:$0xff] %v1429
        %1460 = vst [vmem:[%s380 + $0x10] sm:$0xff] %v1442
        %1461 = vst [vmem:[%s380 + $0x18] sm:$0xff] %v1455
        %s1462 = sand.u32 %s269, 1
        %s1463 = scalar_lea.sflag [#allocation4], %s1462
        %s1464 = sand.u32 %s269, 1
        %s1465 = smul.addr %s1464, 32
        %s1466 = scalar_lea.vmem [#allocation3], %s1465
        // Predicated region
        $region65: #{tpu_custom_call.1} parent=63 // pred_check
          %p1467 = pneg %p279
        $region66: #{tpu_custom_call.1} parent=63 // pred_check_branch
          %1469 = sbr.rel (%p1467) target = $region68
        $region67: #{tpu_custom_call.1} parent=63 // pred_region
          %s1470 = smul.u32 4, %s25
          %1472 = vsyncadd %s1463, 0
          %s1473 = smul.addr %s1470, 8
          %s1474 = scalar_lea.hbm %s11, %s1473
          %s1476 = sshll.u32 %s1466, 4
          %s1477 = int_to_ptr.vmem [resolvable:$true] %s1476
          %s1478 = sshll.u32 %s1474, 4
          %s1479 = int_to_ptr.hbm [resolvable:$true] %s1478
          %1481 = dma.vmem_to_hbm [thread:$0]  %s1477, 512, %s1479, %s1463
        $region68: #{tpu_custom_call.1} parent=63 // pred_fallthru
          _
      $region64: #{tpu_custom_call.1} parent=5 // pred_fallthru
        _
      %p1482 = scmp.le.s32.totalorder 2, %s20
      // Predicated region
      $region69: #{tpu_custom_call.1} parent=5 // pred_check
        %p1483 = pneg %p1482
      $region70: #{tpu_custom_call.1} parent=5 // pred_check_branch
        %1485 = sbr.rel (%p1483) target = $region72
      $region71: #{tpu_custom_call.1} parent=5 // pred_region
        %s1486 = ssub.s32 %s20, 2
        // Predicated region
        $region73: #{tpu_custom_call.1} parent=71 // pred_check
          %p1487 = pneg %p285
        $region74: #{tpu_custom_call.1} parent=71 // pred_check_branch
          %1489 = sbr.rel (%p1487) target = $region76
        $region75: #{tpu_custom_call.1} parent=71 // pred_region
          %s1490 = sand.u32 %s270, 1
          %s1491 = scalar_lea.sflag [#allocation4], %s1490
          %s1492 = sand.u32 %s270, 1
          %s1493 = smul.addr %s1492, 32
          %s1494 = scalar_lea.vmem [#allocation3], %s1493
          %1496 = dma.done %s1491, 512
        $region76: #{tpu_custom_call.1} parent=71 // pred_fallthru
          _
      $region72: #{tpu_custom_call.1} parent=5 // pred_fallthru
        _
    $region6: #{tpu_custom_call.1} parent=1 // loop_footer
      %s24 = sadd.s32 1, %s20
    $region7: #{tpu_custom_call.1} parent=1 // loop_footer_branch
      %19 = sbr.rel target = $region3
    $region8: #{tpu_custom_call.1} parent=1 // loop_exit
      _
    %1497 = vsyncpa [#allocation4], 1
    %s1498 = scalar_lea.sflag [#allocation4], 1
    %1499 = vsyncpa %s1498, 1

</llo_original>
